<compile_context>
chip_gen: v7x
topology: tpu7x:2x2x1
jax: 0.10.0
libtpu: 0.0.40
codegen_flags: <defaults>
</compile_context>

<pallas_src>
import jax
import jax.numpy as jnp
from jax.experimental import pallas as pl
from jax.experimental.pallas import tpu as pltpu

NODE_NUMBER = 128  # args.node_number (lane-aligned for TPU)


def walk_kernel(adj_ref,        # (N, N) f32  whole adjacency, resident in VMEM
                attn_ref,       # (1, N) f32  attention vector
                start_ref,      # (B, 1) i32  start node per walker (this group)
                u_ref,          # (K, B, N) f32  uniforms per step/walker
                new_nodes_ref,  # (K, B) i32  sampled node per step/walker
                scores_ref,     # (K, B) f32  attention score per step/walker
                probs0_ref):    # (B, N) f32  normalized weights of step 0
    K, B, N = u_ref.shape

    adj = adj_ref[...]                                   # (N, N)
    attn = attn_ref[...]                                 # (1, N)
    lane = jax.lax.broadcasted_iota(jnp.int32, (B, N), 1)

    nodes = start_ref[...]                               # (B, 1) current nodes

    nodes_steps = []
    score_steps = []
    # K is small & static; steps are truly sequential (node carry), unroll.
    for k in range(K):
        # Row gather via one-hot MXU matmul: rows[b, :] = adj[nodes[b], :].
        onehot = (lane == nodes).astype(jnp.float32)                    # (B, N)
        rows = jnp.dot(onehot, adj, preferred_element_type=jnp.float32)  # (B, N)
        w = rows * attn                                                  # (B, N)

        if k == 0:
            # Normalized neighbour weights -- only the first step is consumed,
            # so only this step pays the reduce + divide + writeback.
            total = jnp.sum(w, axis=-1, keepdims=True)
            # TODO(synk): isolated node (total == 0) yields NaN probs here; the
            # PyTorch reference (np.random.choice) raises instead of sampling.
            probs0_ref[...] = w / total

        # Gumbel-max categorical draw over the unnormalized weights (VPU/EUP):
        # distributionally identical to np.random.choice(p=w/sum(w)).
        u = jnp.maximum(u_ref[k], 1e-12)                 # avoid log(0)
        gumbel = -jnp.log(-jnp.log(u))
        logits = jnp.where(w > 0.0, jnp.log(w) + gumbel, -1e30)
        new_nodes = jnp.argmax(logits, axis=-1).astype(jnp.int32)       # (B,)

        # attention_score = attention[new_node]  (masked-sum gather)
        score = jnp.sum(
            jnp.where(lane == new_nodes[:, None], attn, 0.0), axis=-1)  # (B,)

        nodes_steps.append(new_nodes)
        score_steps.append(score)
        nodes = new_nodes[:, None]                       # carry to next step

    new_nodes_ref[...] = jnp.stack(nodes_steps, axis=0)  # (K, B)
    scores_ref[...] = jnp.stack(score_steps, axis=0)     # (K, B)


def random_walk(adj_matrix, attention, start_nodes, uniforms,
                *, groups, walkers, steps):
    """Fused K-step StepNetworkLayer walk for groups x walkers independent walkers.

    Returns (new_nodes[G,K,B] i32, scores[G,K,B] f32, probs0[G,B,N] f32) where
    probs0 are the normalized neighbour weights of the first step (the only
    step whose probabilities the original forward exposes for sampling).
    """
    n = adj_matrix.shape[0]
    G, B, K = groups, walkers, steps
    adj = adj_matrix.astype(jnp.float32)
    attn = attention.astype(jnp.float32).reshape(1, n)
    starts = start_nodes.astype(jnp.int32).reshape(G, B, 1)
    u = uniforms.astype(jnp.float32).reshape(G, K, B, n)

    grid_spec = pltpu.PrefetchScalarGridSpec(
        num_scalar_prefetch=0,
        grid=(G,),
        in_specs=[
            # Adjacency & attention: constant block index across the grid ->
            # DMA'd once, resident in VMEM for all walker groups.
            pl.BlockSpec((n, n), lambda g: (0, 0)),
            pl.BlockSpec((1, n), lambda g: (0, 0)),
            pl.BlockSpec((None, B, 1), lambda g: (g, 0, 0)),        # start nodes
            pl.BlockSpec((None, K, B, n), lambda g: (g, 0, 0, 0)),  # uniforms
        ],
        out_specs=(
            pl.BlockSpec((None, K, B), lambda g: (g, 0, 0)),        # new nodes
            pl.BlockSpec((None, K, B), lambda g: (g, 0, 0)),        # scores
            pl.BlockSpec((None, B, n), lambda g: (g, 0, 0)),        # step-0 probs
        ),
    )

    return pl.pallas_call(
        walk_kernel,
        out_shape=(
            jax.ShapeDtypeStruct((G, K, B), jnp.int32),
            jax.ShapeDtypeStruct((G, K, B), jnp.float32),
            jax.ShapeDtypeStruct((G, B, n), jnp.float32),
        ),
        grid_spec=grid_spec,
        compiler_params=pltpu.CompilerParams(
            # Walker groups are independent -> shard across v7x's 2 TensorCores.
            dimension_semantics=("parallel",)),
    )(adj, attn, starts, u)


if __name__ == "__main__":
    key = jax.random.PRNGKey(0)
    k_w, k_m, k_start, k_u = jax.random.split(key, 4)

    n = NODE_NUMBER
    G, B, K = 2, 8, 8  # walker groups x walkers per group x walk steps

    # Deterministic synthetic graph: symmetric weighted adjacency, zero
    # diagonal, plus a ring so every node has at least one neighbour
    # (no isolated nodes -> no NaN / np.random.choice-error case).
    weights = jax.random.uniform(k_w, (n, n), dtype=jnp.float32,
                                 minval=0.1, maxval=1.0)
    mask = (jax.random.uniform(k_m, (n, n)) < 0.5).astype(jnp.float32)
    adj = weights * mask
    ring = jnp.zeros((n, n), jnp.float32).at[
        jnp.arange(n), (jnp.arange(n) + 1) % n].set(0.5)
    adj = adj + ring
    adj = 0.5 * (adj + adj.T)
    adj = adj * (1.0 - jnp.eye(n, dtype=jnp.float32))

    # reset_attention(): attention = ones(node_number) / node_number
    attention = jnp.ones((n,), dtype=jnp.float32) / n

    start_nodes = jax.random.randint(k_start, (G, B), 0, n, dtype=jnp.int32)
    uniforms = jax.random.uniform(k_u, (G, K, B, n), dtype=jnp.float32)

    new_nodes, scores, probs0 = random_walk(
        adj, attention, start_nodes, uniforms, groups=G, walkers=B, steps=K)
    jax.block_until_ready((new_nodes, scores, probs0))

    # --- semantics check against plain JAX ----------------------------------
    # Step-0 normalized neighbour weights match the reference exactly.
    ref_w = adj[start_nodes.reshape(-1)] * attention[None, :]         # (G*B, N)
    ref_probs = ref_w / jnp.sum(ref_w, axis=-1, keepdims=True)
    assert probs0.shape == (G, B, n)
    assert jnp.allclose(probs0.reshape(G * B, n), ref_probs, rtol=1e-5, atol=1e-6)
    assert bool(jnp.all(jnp.abs(jnp.sum(probs0, axis=-1) - 1.0) < 1e-4))

    # Every step: sampled node is a real neighbour of the previous node
    # (zero-probability nodes are never sampled) and score == attention[node].
    prev = start_nodes
    for k in range(K):
        cur = new_nodes[:, k, :]
        assert bool(jnp.all((cur >= 0) & (cur < n)))
        edge_w = adj[prev.reshape(-1), cur.reshape(-1)]
        assert bool(jnp.all(edge_w > 0.0))
        assert jnp.allclose(scores[:, k, :].reshape(-1),
                            attention[cur.reshape(-1)], atol=1e-6)
        prev = cur

    print("KERNEL_OK")
</pallas_src>

<mosaic_0001>
module attributes {stable_mosaic.version = 11 : i64} {
  func.func @walk_kernel(%arg0: i32, %arg1: memref<128x128xf32, #tpu.memory_space<vmem>>, %arg2: memref<1x128xf32, #tpu.memory_space<vmem>>, %arg3: memref<1x8x1xi32, #tpu.memory_space<vmem>>, %arg4: memref<1x8x8x128xf32, #tpu.memory_space<vmem>>, %arg5: memref<1x8x8xi32, #tpu.memory_space<vmem>>, %arg6: memref<1x8x8xf32, #tpu.memory_space<vmem>>, %arg7: memref<1x8x128xf32, #tpu.memory_space<vmem>>) attributes {dimension_semantics = [#tpu.dimension_semantics<parallel>], iteration_bounds = array<i64: 2>, scalar_prefetch = 0 : i64, scratch_operands = 0 : i64, tpu.core_type = #tpu.core_type<tc>, window_params = [{pipeline_mode = #tpu.pipeline_mode<synchronous>, transform_indices = @transform_0, window_bounds = array<i64: 128, 128>}, {pipeline_mode = #tpu.pipeline_mode<synchronous>, transform_indices = @transform_1, window_bounds = array<i64: 1, 128>}, {transform_indices = @transform_2, window_bounds = array<i64: 1, 8, 1>}, {transform_indices = @transform_3, window_bounds = array<i64: 1, 8, 8, 128>}, {transform_indices = @transform_4, window_bounds = array<i64: 1, 8, 8>}, {transform_indices = @transform_5, window_bounds = array<i64: 1, 8, 8>}, {transform_indices = @transform_6, window_bounds = array<i64: 1, 8, 128>}]} {
    %c0 = arith.constant 0 : index
    %c0_0 = arith.constant 0 : index
    %0 = vector.load %arg1[%c0, %c0_0] : memref<128x128xf32, #tpu.memory_space<vmem>>, vector<128x128xf32>
    %c0_1 = arith.constant 0 : index
    %c0_2 = arith.constant 0 : index
    %1 = vector.load %arg2[%c0_1, %c0_2] : memref<1x128xf32, #tpu.memory_space<vmem>>, vector<1x128xf32>
    %2 = tpu.iota {dimensions = array<i32: 1>} : vector<8x128xi32>
    %c0_3 = arith.constant 0 : index
    %c0_4 = arith.constant 0 : index
    %c0_5 = arith.constant 0 : index
    %3 = vector.load %arg3[%c0_3, %c0_4, %c0_5] : memref<1x8x1xi32, #tpu.memory_space<vmem>>, vector<1x8x1xi32>
    %4 = vector.shape_cast %3 : vector<1x8x1xi32> to vector<8x1xi32>
    %5 = vector.broadcast %4 : vector<8x1xi32> to vector<8x128xi32>
    %6 = arith.cmpi eq, %2, %5 : vector<8x128xi32>
    %7 = arith.extui %6 : vector<8x128xi1> to vector<8x128xi32>
    %8 = arith.sitofp %7 : vector<8x128xi32> to vector<8x128xf32>
    %cst = arith.constant dense<0.000000e+00> : vector<8x128xf32>
    %9 = tpu.matmul %8, %0, %cst {dimension_numbers = #tpu.dot_dimension_numbers<[1], [0], [0], [1], [0, 0, 1, 1], [], []>} : vector<8x128xf32>, vector<128x128xf32>, vector<8x128xf32> -> vector<8x128xf32>
    %10 = vector.broadcast %1 : vector<1x128xf32> to vector<8x128xf32>
    %11 = arith.mulf %9, %10 : vector<8x128xf32>
    %cst_6 = arith.constant dense<0.000000e+00> : vector<8xf32>
    %12 = vector.multi_reduction <add>, %11, %cst_6 [1] : vector<8x128xf32> to vector<8xf32>
    %13 = vector.shape_cast %12 : vector<8xf32> to vector<8x1xf32>
    %14 = vector.broadcast %13 : vector<8x1xf32> to vector<8x128xf32>
    %15 = arith.divf %11, %14 : vector<8x128xf32>
    %c0_7 = arith.constant 0 : index
    %c0_8 = arith.constant 0 : index
    %c0_9 = arith.constant 0 : index
    %16 = vector.load %arg7[%c0_7, %c0_8, %c0_9] : memref<1x8x128xf32, #tpu.memory_space<vmem>>, vector<1x8x128xf32>
    %17 = vector.shape_cast %16 : vector<1x8x128xf32> to vector<8x128xf32>
    %18 = vector.shape_cast %15 : vector<8x128xf32> to vector<1x8x128xf32>
    tpu.vector_store %arg7[%c0_7, %c0_8, %c0_9], %18 {strides = array<i32>} : memref<1x8x128xf32, #tpu.memory_space<vmem>>, vector<1x8x128xf32>,
    %c0_10 = arith.constant 0 : index
    %c0_11 = arith.constant 0 : index
    %c0_12 = arith.constant 0 : index
    %c0_13 = arith.constant 0 : index
    %19 = vector.load %arg4[%c0_10, %c0_11, %c0_12, %c0_13] : memref<1x8x8x128xf32, #tpu.memory_space<vmem>>, vector<1x1x8x128xf32>
    %20 = vector.shape_cast %19 : vector<1x1x8x128xf32> to vector<8x128xf32>
    %cst_14 = arith.constant 9.99999996E-13 : f32
    %21 = vector.broadcast %cst_14 : f32 to vector<8x128xf32>
    %22 = arith.maximumf %20, %21 : vector<8x128xf32>
    %23 = math.log %22 : vector<8x128xf32>
    %cst_15 = arith.constant 0.000000e+00 : f32
    %24 = vector.broadcast %cst_15 : f32 to vector<8x128xf32>
    %25 = arith.subf %24, %23 : vector<8x128xf32>
    %26 = math.log %25 : vector<8x128xf32>
    %cst_16 = arith.constant 0.000000e+00 : f32
    %27 = vector.broadcast %cst_16 : f32 to vector<8x128xf32>
    %28 = arith.subf %27, %26 : vector<8x128xf32>
    %cst_17 = arith.constant 0.000000e+00 : f32
    %29 = vector.broadcast %cst_17 : f32 to vector<8x128xf32>
    %30 = arith.cmpf ogt, %11, %29 : vector<8x128xf32>
    %31 = math.log %11 : vector<8x128xf32>
    %32 = arith.addf %31, %28 : vector<8x128xf32>
    %cst_18 = arith.constant -1.000000e+30 : f32
    %33 = vector.broadcast %cst_18 : f32 to vector<8x128xf32>
    %34 = arith.select %30, %32, %33 : vector<8x128xi1>, vector<8x128xf32>
    %35 = tpu.reduce_index %34 {axis = 1 : i32, kind = #tpu.reduction_kind<arg_max>} : vector<8x128xf32> -> vector<8xi32>
    %36 = vector.shape_cast %35 : vector<8xi32> to vector<8x1xi32>
    %37 = vector.broadcast %36 : vector<8x1xi32> to vector<8x128xi32>
    %38 = arith.cmpi eq, %2, %37 : vector<8x128xi32>
    %cst_19 = arith.constant 0.000000e+00 : f32
    %39 = vector.shape_cast %1 : vector<1x128xf32> to vector<1x128xf32>
    %40 = vector.broadcast %39 : vector<1x128xf32> to vector<8x128xf32>
    %41 = vector.broadcast %cst_19 : f32 to vector<8x128xf32>
    %42 = arith.select %38, %40, %41 : vector<8x128xi1>, vector<8x128xf32>
    %cst_20 = arith.constant dense<0.000000e+00> : vector<8xf32>
    %43 = vector.multi_reduction <add>, %42, %cst_20 [1] : vector<8x128xf32> to vector<8xf32>
    %44 = vector.shape_cast %35 : vector<8xi32> to vector<8x1xi32>
    %45 = vector.broadcast %44 : vector<8x1xi32> to vector<8x128xi32>
    %46 = arith.cmpi eq, %2, %45 : vector<8x128xi32>
    %47 = arith.extui %46 : vector<8x128xi1> to vector<8x128xi32>
    %48 = arith.sitofp %47 : vector<8x128xi32> to vector<8x128xf32>
    %cst_21 = arith.constant dense<0.000000e+00> : vector<8x128xf32>
    %49 = tpu.matmul %48, %0, %cst_21 {dimension_numbers = #tpu.dot_dimension_numbers<[1], [0], [0], [1], [0, 0, 1, 1], [], []>} : vector<8x128xf32>, vector<128x128xf32>, vector<8x128xf32> -> vector<8x128xf32>
    %50 = vector.broadcast %1 : vector<1x128xf32> to vector<8x128xf32>
    %51 = arith.mulf %49, %50 : vector<8x128xf32>
    %c0_22 = arith.constant 0 : index
    %c1 = arith.constant 1 : index
    %c0_23 = arith.constant 0 : index
    %c0_24 = arith.constant 0 : index
    %52 = vector.load %arg4[%c0_22, %c1, %c0_23, %c0_24] : memref<1x8x8x128xf32, #tpu.memory_space<vmem>>, vector<1x1x8x128xf32>
    %53 = vector.shape_cast %52 : vector<1x1x8x128xf32> to vector<8x128xf32>
    %cst_25 = arith.constant 9.99999996E-13 : f32
    %54 = vector.broadcast %cst_25 : f32 to vector<8x128xf32>
    %55 = arith.maximumf %53, %54 : vector<8x128xf32>
    %56 = math.log %55 : vector<8x128xf32>
    %cst_26 = arith.constant 0.000000e+00 : f32
    %57 = vector.broadcast %cst_26 : f32 to vector<8x128xf32>
    %58 = arith.subf %57, %56 : vector<8x128xf32>
    %59 = math.log %58 : vector<8x128xf32>
    %cst_27 = arith.constant 0.000000e+00 : f32
    %60 = vector.broadcast %cst_27 : f32 to vector<8x128xf32>
    %61 = arith.subf %60, %59 : vector<8x128xf32>
    %cst_28 = arith.constant 0.000000e+00 : f32
    %62 = vector.broadcast %cst_28 : f32 to vector<8x128xf32>
    %63 = arith.cmpf ogt, %51, %62 : vector<8x128xf32>
    %64 = math.log %51 : vector<8x128xf32>
    %65 = arith.addf %64, %61 : vector<8x128xf32>
    %cst_29 = arith.constant -1.000000e+30 : f32
    %66 = vector.broadcast %cst_29 : f32 to vector<8x128xf32>
    %67 = arith.select %63, %65, %66 : vector<8x128xi1>, vector<8x128xf32>
    %68 = tpu.reduce_index %67 {axis = 1 : i32, kind = #tpu.reduction_kind<arg_max>} : vector<8x128xf32> -> vector<8xi32>
    %69 = vector.shape_cast %68 : vector<8xi32> to vector<8x1xi32>
    %70 = vector.broadcast %69 : vector<8x1xi32> to vector<8x128xi32>
    %71 = arith.cmpi eq, %2, %70 : vector<8x128xi32>
    %cst_30 = arith.constant 0.000000e+00 : f32
    %72 = vector.shape_cast %1 : vector<1x128xf32> to vector<1x128xf32>
    %73 = vector.broadcast %72 : vector<1x128xf32> to vector<8x128xf32>
    %74 = vector.broadcast %cst_30 : f32 to vector<8x128xf32>
    %75 = arith.select %71, %73, %74 : vector<8x128xi1>, vector<8x128xf32>
    %cst_31 = arith.constant dense<0.000000e+00> : vector<8xf32>
    %76 = vector.multi_reduction <add>, %75, %cst_31 [1] : vector<8x128xf32> to vector<8xf32>
    %77 = vector.shape_cast %68 : vector<8xi32> to vector<8x1xi32>
    %78 = vector.broadcast %77 : vector<8x1xi32> to vector<8x128xi32>
    %79 = arith.cmpi eq, %2, %78 : vector<8x128xi32>
    %80 = arith.extui %79 : vector<8x128xi1> to vector<8x128xi32>
    %81 = arith.sitofp %80 : vector<8x128xi32> to vector<8x128xf32>
    %cst_32 = arith.constant dense<0.000000e+00> : vector<8x128xf32>
    %82 = tpu.matmul %81, %0, %cst_32 {dimension_numbers = #tpu.dot_dimension_numbers<[1], [0], [0], [1], [0, 0, 1, 1], [], []>} : vector<8x128xf32>, vector<128x128xf32>, vector<8x128xf32> -> vector<8x128xf32>
    %83 = vector.broadcast %1 : vector<1x128xf32> to vector<8x128xf32>
    %84 = arith.mulf %82, %83 : vector<8x128xf32>
    %c0_33 = arith.constant 0 : index
    %c2 = arith.constant 2 : index
    %c0_34 = arith.constant 0 : index
    %c0_35 = arith.constant 0 : index
    %85 = vector.load %arg4[%c0_33, %c2, %c0_34, %c0_35] : memref<1x8x8x128xf32, #tpu.memory_space<vmem>>, vector<1x1x8x128xf32>
    %86 = vector.shape_cast %85 : vector<1x1x8x128xf32> to vector<8x128xf32>
    %cst_36 = arith.constant 9.99999996E-13 : f32
    %87 = vector.broadcast %cst_36 : f32 to vector<8x128xf32>
    %88 = arith.maximumf %86, %87 : vector<8x128xf32>
    %89 = math.log %88 : vector<8x128xf32>
    %cst_37 = arith.constant 0.000000e+00 : f32
    %90 = vector.broadcast %cst_37 : f32 to vector<8x128xf32>
    %91 = arith.subf %90, %89 : vector<8x128xf32>
    %92 = math.log %91 : vector<8x128xf32>
    %cst_38 = arith.constant 0.000000e+00 : f32
    %93 = vector.broadcast %cst_38 : f32 to vector<8x128xf32>
    %94 = arith.subf %93, %92 : vector<8x128xf32>
    %cst_39 = arith.constant 0.000000e+00 : f32
    %95 = vector.broadcast %cst_39 : f32 to vector<8x128xf32>
    %96 = arith.cmpf ogt, %84, %95 : vector<8x128xf32>
    %97 = math.log %84 : vector<8x128xf32>
    %98 = arith.addf %97, %94 : vector<8x128xf32>
    %cst_40 = arith.constant -1.000000e+30 : f32
    %99 = vector.broadcast %cst_40 : f32 to vector<8x128xf32>
    %100 = arith.select %96, %98, %99 : vector<8x128xi1>, vector<8x128xf32>
    %101 = tpu.reduce_index %100 {axis = 1 : i32, kind = #tpu.reduction_kind<arg_max>} : vector<8x128xf32> -> vector<8xi32>
    %102 = vector.shape_cast %101 : vector<8xi32> to vector<8x1xi32>
    %103 = vector.broadcast %102 : vector<8x1xi32> to vector<8x128xi32>
    %104 = arith.cmpi eq, %2, %103 : vector<8x128xi32>
    %cst_41 = arith.constant 0.000000e+00 : f32
    %105 = vector.shape_cast %1 : vector<1x128xf32> to vector<1x128xf32>
    %106 = vector.broadcast %105 : vector<1x128xf32> to vector<8x128xf32>
    %107 = vector.broadcast %cst_41 : f32 to vector<8x128xf32>
    %108 = arith.select %104, %106, %107 : vector<8x128xi1>, vector<8x128xf32>
    %cst_42 = arith.constant dense<0.000000e+00> : vector<8xf32>
    %109 = vector.multi_reduction <add>, %108, %cst_42 [1] : vector<8x128xf32> to vector<8xf32>
    %110 = vector.shape_cast %101 : vector<8xi32> to vector<8x1xi32>
    %111 = vector.broadcast %110 : vector<8x1xi32> to vector<8x128xi32>
    %112 = arith.cmpi eq, %2, %111 : vector<8x128xi32>
    %113 = arith.extui %112 : vector<8x128xi1> to vector<8x128xi32>
    %114 = arith.sitofp %113 : vector<8x128xi32> to vector<8x128xf32>
    %cst_43 = arith.constant dense<0.000000e+00> : vector<8x128xf32>
    %115 = tpu.matmul %114, %0, %cst_43 {dimension_numbers = #tpu.dot_dimension_numbers<[1], [0], [0], [1], [0, 0, 1, 1], [], []>} : vector<8x128xf32>, vector<128x128xf32>, vector<8x128xf32> -> vector<8x128xf32>
    %116 = vector.broadcast %1 : vector<1x128xf32> to vector<8x128xf32>
    %117 = arith.mulf %115, %116 : vector<8x128xf32>
    %c0_44 = arith.constant 0 : index
    %c3 = arith.constant 3 : index
    %c0_45 = arith.constant 0 : index
    %c0_46 = arith.constant 0 : index
    %118 = vector.load %arg4[%c0_44, %c3, %c0_45, %c0_46] : memref<1x8x8x128xf32, #tpu.memory_space<vmem>>, vector<1x1x8x128xf32>
    %119 = vector.shape_cast %118 : vector<1x1x8x128xf32> to vector<8x128xf32>
    %cst_47 = arith.constant 9.99999996E-13 : f32
    %120 = vector.broadcast %cst_47 : f32 to vector<8x128xf32>
    %121 = arith.maximumf %119, %120 : vector<8x128xf32>
    %122 = math.log %121 : vector<8x128xf32>
    %cst_48 = arith.constant 0.000000e+00 : f32
    %123 = vector.broadcast %cst_48 : f32 to vector<8x128xf32>
    %124 = arith.subf %123, %122 : vector<8x128xf32>
    %125 = math.log %124 : vector<8x128xf32>
    %cst_49 = arith.constant 0.000000e+00 : f32
    %126 = vector.broadcast %cst_49 : f32 to vector<8x128xf32>
    %127 = arith.subf %126, %125 : vector<8x128xf32>
    %cst_50 = arith.constant 0.000000e+00 : f32
    %128 = vector.broadcast %cst_50 : f32 to vector<8x128xf32>
    %129 = arith.cmpf ogt, %117, %128 : vector<8x128xf32>
    %130 = math.log %117 : vector<8x128xf32>
    %131 = arith.addf %130, %127 : vector<8x128xf32>
    %cst_51 = arith.constant -1.000000e+30 : f32
    %132 = vector.broadcast %cst_51 : f32 to vector<8x128xf32>
    %133 = arith.select %129, %131, %132 : vector<8x128xi1>, vector<8x128xf32>
    %134 = tpu.reduce_index %133 {axis = 1 : i32, kind = #tpu.reduction_kind<arg_max>} : vector<8x128xf32> -> vector<8xi32>
    %135 = vector.shape_cast %134 : vector<8xi32> to vector<8x1xi32>
    %136 = vector.broadcast %135 : vector<8x1xi32> to vector<8x128xi32>
    %137 = arith.cmpi eq, %2, %136 : vector<8x128xi32>
    %cst_52 = arith.constant 0.000000e+00 : f32
    %138 = vector.shape_cast %1 : vector<1x128xf32> to vector<1x128xf32>
    %139 = vector.broadcast %138 : vector<1x128xf32> to vector<8x128xf32>
    %140 = vector.broadcast %cst_52 : f32 to vector<8x128xf32>
    %141 = arith.select %137, %139, %140 : vector<8x128xi1>, vector<8x128xf32>
    %cst_53 = arith.constant dense<0.000000e+00> : vector<8xf32>
    %142 = vector.multi_reduction <add>, %141, %cst_53 [1] : vector<8x128xf32> to vector<8xf32>
    %143 = vector.shape_cast %134 : vector<8xi32> to vector<8x1xi32>
    %144 = vector.broadcast %143 : vector<8x1xi32> to vector<8x128xi32>
    %145 = arith.cmpi eq, %2, %144 : vector<8x128xi32>
    %146 = arith.extui %145 : vector<8x128xi1> to vector<8x128xi32>
    %147 = arith.sitofp %146 : vector<8x128xi32> to vector<8x128xf32>
    %cst_54 = arith.constant dense<0.000000e+00> : vector<8x128xf32>
    %148 = tpu.matmul %147, %0, %cst_54 {dimension_numbers = #tpu.dot_dimension_numbers<[1], [0], [0], [1], [0, 0, 1, 1], [], []>} : vector<8x128xf32>, vector<128x128xf32>, vector<8x128xf32> -> vector<8x128xf32>
    %149 = vector.broadcast %1 : vector<1x128xf32> to vector<8x128xf32>
    %150 = arith.mulf %148, %149 : vector<8x128xf32>
    %c0_55 = arith.constant 0 : index
    %c4 = arith.constant 4 : index
    %c0_56 = arith.constant 0 : index
    %c0_57 = arith.constant 0 : index
    %151 = vector.load %arg4[%c0_55, %c4, %c0_56, %c0_57] : memref<1x8x8x128xf32, #tpu.memory_space<vmem>>, vector<1x1x8x128xf32>
    %152 = vector.shape_cast %151 : vector<1x1x8x128xf32> to vector<8x128xf32>
    %cst_58 = arith.constant 9.99999996E-13 : f32
    %153 = vector.broadcast %cst_58 : f32 to vector<8x128xf32>
    %154 = arith.maximumf %152, %153 : vector<8x128xf32>
    %155 = math.log %154 : vector<8x128xf32>
    %cst_59 = arith.constant 0.000000e+00 : f32
    %156 = vector.broadcast %cst_59 : f32 to vector<8x128xf32>
    %157 = arith.subf %156, %155 : vector<8x128xf32>
    %158 = math.log %157 : vector<8x128xf32>
    %cst_60 = arith.constant 0.000000e+00 : f32
    %159 = vector.broadcast %cst_60 : f32 to vector<8x128xf32>
    %160 = arith.subf %159, %158 : vector<8x128xf32>
    %cst_61 = arith.constant 0.000000e+00 : f32
    %161 = vector.broadcast %cst_61 : f32 to vector<8x128xf32>
    %162 = arith.cmpf ogt, %150, %161 : vector<8x128xf32>
    %163 = math.log %150 : vector<8x128xf32>
    %164 = arith.addf %163, %160 : vector<8x128xf32>
    %cst_62 = arith.constant -1.000000e+30 : f32
    %165 = vector.broadcast %cst_62 : f32 to vector<8x128xf32>
    %166 = arith.select %162, %164, %165 : vector<8x128xi1>, vector<8x128xf32>
    %167 = tpu.reduce_index %166 {axis = 1 : i32, kind = #tpu.reduction_kind<arg_max>} : vector<8x128xf32> -> vector<8xi32>
    %168 = vector.shape_cast %167 : vector<8xi32> to vector<8x1xi32>
    %169 = vector.broadcast %168 : vector<8x1xi32> to vector<8x128xi32>
    %170 = arith.cmpi eq, %2, %169 : vector<8x128xi32>
    %cst_63 = arith.constant 0.000000e+00 : f32
    %171 = vector.shape_cast %1 : vector<1x128xf32> to vector<1x128xf32>
    %172 = vector.broadcast %171 : vector<1x128xf32> to vector<8x128xf32>
    %173 = vector.broadcast %cst_63 : f32 to vector<8x128xf32>
    %174 = arith.select %170, %172, %173 : vector<8x128xi1>, vector<8x128xf32>
    %cst_64 = arith.constant dense<0.000000e+00> : vector<8xf32>
    %175 = vector.multi_reduction <add>, %174, %cst_64 [1] : vector<8x128xf32> to vector<8xf32>
    %176 = vector.shape_cast %167 : vector<8xi32> to vector<8x1xi32>
    %177 = vector.broadcast %176 : vector<8x1xi32> to vector<8x128xi32>
    %178 = arith.cmpi eq, %2, %177 : vector<8x128xi32>
    %179 = arith.extui %178 : vector<8x128xi1> to vector<8x128xi32>
    %180 = arith.sitofp %179 : vector<8x128xi32> to vector<8x128xf32>
    %cst_65 = arith.constant dense<0.000000e+00> : vector<8x128xf32>
    %181 = tpu.matmul %180, %0, %cst_65 {dimension_numbers = #tpu.dot_dimension_numbers<[1], [0], [0], [1], [0, 0, 1, 1], [], []>} : vector<8x128xf32>, vector<128x128xf32>, vector<8x128xf32> -> vector<8x128xf32>
    %182 = vector.broadcast %1 : vector<1x128xf32> to vector<8x128xf32>
    %183 = arith.mulf %181, %182 : vector<8x128xf32>
    %c0_66 = arith.constant 0 : index
    %c5 = arith.constant 5 : index
    %c0_67 = arith.constant 0 : index
    %c0_68 = arith.constant 0 : index
    %184 = vector.load %arg4[%c0_66, %c5, %c0_67, %c0_68] : memref<1x8x8x128xf32, #tpu.memory_space<vmem>>, vector<1x1x8x128xf32>
    %185 = vector.shape_cast %184 : vector<1x1x8x128xf32> to vector<8x128xf32>
    %cst_69 = arith.constant 9.99999996E-13 : f32
    %186 = vector.broadcast %cst_69 : f32 to vector<8x128xf32>
    %187 = arith.maximumf %185, %186 : vector<8x128xf32>
    %188 = math.log %187 : vector<8x128xf32>
    %cst_70 = arith.constant 0.000000e+00 : f32
    %189 = vector.broadcast %cst_70 : f32 to vector<8x128xf32>
    %190 = arith.subf %189, %188 : vector<8x128xf32>
    %191 = math.log %190 : vector<8x128xf32>
    %cst_71 = arith.constant 0.000000e+00 : f32
    %192 = vector.broadcast %cst_71 : f32 to vector<8x128xf32>
    %193 = arith.subf %192, %191 : vector<8x128xf32>
    %cst_72 = arith.constant 0.000000e+00 : f32
    %194 = vector.broadcast %cst_72 : f32 to vector<8x128xf32>
    %195 = arith.cmpf ogt, %183, %194 : vector<8x128xf32>
    %196 = math.log %183 : vector<8x128xf32>
    %197 = arith.addf %196, %193 : vector<8x128xf32>
    %cst_73 = arith.constant -1.000000e+30 : f32
    %198 = vector.broadcast %cst_73 : f32 to vector<8x128xf32>
    %199 = arith.select %195, %197, %198 : vector<8x128xi1>, vector<8x128xf32>
    %200 = tpu.reduce_index %199 {axis = 1 : i32, kind = #tpu.reduction_kind<arg_max>} : vector<8x128xf32> -> vector<8xi32>
    %201 = vector.shape_cast %200 : vector<8xi32> to vector<8x1xi32>
    %202 = vector.broadcast %201 : vector<8x1xi32> to vector<8x128xi32>
    %203 = arith.cmpi eq, %2, %202 : vector<8x128xi32>
    %cst_74 = arith.constant 0.000000e+00 : f32
    %204 = vector.shape_cast %1 : vector<1x128xf32> to vector<1x128xf32>
    %205 = vector.broadcast %204 : vector<1x128xf32> to vector<8x128xf32>
    %206 = vector.broadcast %cst_74 : f32 to vector<8x128xf32>
    %207 = arith.select %203, %205, %206 : vector<8x128xi1>, vector<8x128xf32>
    %cst_75 = arith.constant dense<0.000000e+00> : vector<8xf32>
    %208 = vector.multi_reduction <add>, %207, %cst_75 [1] : vector<8x128xf32> to vector<8xf32>
    %209 = vector.shape_cast %200 : vector<8xi32> to vector<8x1xi32>
    %210 = vector.broadcast %209 : vector<8x1xi32> to vector<8x128xi32>
    %211 = arith.cmpi eq, %2, %210 : vector<8x128xi32>
    %212 = arith.extui %211 : vector<8x128xi1> to vector<8x128xi32>
    %213 = arith.sitofp %212 : vector<8x128xi32> to vector<8x128xf32>
    %cst_76 = arith.constant dense<0.000000e+00> : vector<8x128xf32>
    %214 = tpu.matmul %213, %0, %cst_76 {dimension_numbers = #tpu.dot_dimension_numbers<[1], [0], [0], [1], [0, 0, 1, 1], [], []>} : vector<8x128xf32>, vector<128x128xf32>, vector<8x128xf32> -> vector<8x128xf32>
    %215 = vector.broadcast %1 : vector<1x128xf32> to vector<8x128xf32>
    %216 = arith.mulf %214, %215 : vector<8x128xf32>
    %c0_77 = arith.constant 0 : index
    %c6 = arith.constant 6 : index
    %c0_78 = arith.constant 0 : index
    %c0_79 = arith.constant 0 : index
    %217 = vector.load %arg4[%c0_77, %c6, %c0_78, %c0_79] : memref<1x8x8x128xf32, #tpu.memory_space<vmem>>, vector<1x1x8x128xf32>
    %218 = vector.shape_cast %217 : vector<1x1x8x128xf32> to vector<8x128xf32>
    %cst_80 = arith.constant 9.99999996E-13 : f32
    %219 = vector.broadcast %cst_80 : f32 to vector<8x128xf32>
    %220 = arith.maximumf %218, %219 : vector<8x128xf32>
    %221 = math.log %220 : vector<8x128xf32>
    %cst_81 = arith.constant 0.000000e+00 : f32
    %222 = vector.broadcast %cst_81 : f32 to vector<8x128xf32>
    %223 = arith.subf %222, %221 : vector<8x128xf32>
    %224 = math.log %223 : vector<8x128xf32>
    %cst_82 = arith.constant 0.000000e+00 : f32
    %225 = vector.broadcast %cst_82 : f32 to vector<8x128xf32>
    %226 = arith.subf %225, %224 : vector<8x128xf32>
    %cst_83 = arith.constant 0.000000e+00 : f32
    %227 = vector.broadcast %cst_83 : f32 to vector<8x128xf32>
    %228 = arith.cmpf ogt, %216, %227 : vector<8x128xf32>
    %229 = math.log %216 : vector<8x128xf32>
    %230 = arith.addf %229, %226 : vector<8x128xf32>
    %cst_84 = arith.constant -1.000000e+30 : f32
    %231 = vector.broadcast %cst_84 : f32 to vector<8x128xf32>
    %232 = arith.select %228, %230, %231 : vector<8x128xi1>, vector<8x128xf32>
    %233 = tpu.reduce_index %232 {axis = 1 : i32, kind = #tpu.reduction_kind<arg_max>} : vector<8x128xf32> -> vector<8xi32>
    %234 = vector.shape_cast %233 : vector<8xi32> to vector<8x1xi32>
    %235 = vector.broadcast %234 : vector<8x1xi32> to vector<8x128xi32>
    %236 = arith.cmpi eq, %2, %235 : vector<8x128xi32>
    %cst_85 = arith.constant 0.000000e+00 : f32
    %237 = vector.shape_cast %1 : vector<1x128xf32> to vector<1x128xf32>
    %238 = vector.broadcast %237 : vector<1x128xf32> to vector<8x128xf32>
    %239 = vector.broadcast %cst_85 : f32 to vector<8x128xf32>
    %240 = arith.select %236, %238, %239 : vector<8x128xi1>, vector<8x128xf32>
    %cst_86 = arith.constant dense<0.000000e+00> : vector<8xf32>
    %241 = vector.multi_reduction <add>, %240, %cst_86 [1] : vector<8x128xf32> to vector<8xf32>
    %242 = vector.shape_cast %233 : vector<8xi32> to vector<8x1xi32>
    %243 = vector.broadcast %242 : vector<8x1xi32> to vector<8x128xi32>
    %244 = arith.cmpi eq, %2, %243 : vector<8x128xi32>
    %245 = arith.extui %244 : vector<8x128xi1> to vector<8x128xi32>
    %246 = arith.sitofp %245 : vector<8x128xi32> to vector<8x128xf32>
    %cst_87 = arith.constant dense<0.000000e+00> : vector<8x128xf32>
    %247 = tpu.matmul %246, %0, %cst_87 {dimension_numbers = #tpu.dot_dimension_numbers<[1], [0], [0], [1], [0, 0, 1, 1], [], []>} : vector<8x128xf32>, vector<128x128xf32>, vector<8x128xf32> -> vector<8x128xf32>
    %248 = vector.broadcast %1 : vector<1x128xf32> to vector<8x128xf32>
    %249 = arith.mulf %247, %248 : vector<8x128xf32>
    %c0_88 = arith.constant 0 : index
    %c7 = arith.constant 7 : index
    %c0_89 = arith.constant 0 : index
    %c0_90 = arith.constant 0 : index
    %250 = vector.load %arg4[%c0_88, %c7, %c0_89, %c0_90] : memref<1x8x8x128xf32, #tpu.memory_space<vmem>>, vector<1x1x8x128xf32>
    %251 = vector.shape_cast %250 : vector<1x1x8x128xf32> to vector<8x128xf32>
    %cst_91 = arith.constant 9.99999996E-13 : f32
    %252 = vector.broadcast %cst_91 : f32 to vector<8x128xf32>
    %253 = arith.maximumf %251, %252 : vector<8x128xf32>
    %254 = math.log %253 : vector<8x128xf32>
    %cst_92 = arith.constant 0.000000e+00 : f32
    %255 = vector.broadcast %cst_92 : f32 to vector<8x128xf32>
    %256 = arith.subf %255, %254 : vector<8x128xf32>
    %257 = math.log %256 : vector<8x128xf32>
    %cst_93 = arith.constant 0.000000e+00 : f32
    %258 = vector.broadcast %cst_93 : f32 to vector<8x128xf32>
    %259 = arith.subf %258, %257 : vector<8x128xf32>
    %cst_94 = arith.constant 0.000000e+00 : f32
    %260 = vector.broadcast %cst_94 : f32 to vector<8x128xf32>
    %261 = arith.cmpf ogt, %249, %260 : vector<8x128xf32>
    %262 = math.log %249 : vector<8x128xf32>
    %263 = arith.addf %262, %259 : vector<8x128xf32>
    %cst_95 = arith.constant -1.000000e+30 : f32
    %264 = vector.broadcast %cst_95 : f32 to vector<8x128xf32>
    %265 = arith.select %261, %263, %264 : vector<8x128xi1>, vector<8x128xf32>
    %266 = tpu.reduce_index %265 {axis = 1 : i32, kind = #tpu.reduction_kind<arg_max>} : vector<8x128xf32> -> vector<8xi32>
    %267 = vector.shape_cast %266 : vector<8xi32> to vector<8x1xi32>
    %268 = vector.broadcast %267 : vector<8x1xi32> to vector<8x128xi32>
    %269 = arith.cmpi eq, %2, %268 : vector<8x128xi32>
    %cst_96 = arith.constant 0.000000e+00 : f32
    %270 = vector.shape_cast %1 : vector<1x128xf32> to vector<1x128xf32>
    %271 = vector.broadcast %270 : vector<1x128xf32> to vector<8x128xf32>
    %272 = vector.broadcast %cst_96 : f32 to vector<8x128xf32>
    %273 = arith.select %269, %271, %272 : vector<8x128xi1>, vector<8x128xf32>
    %cst_97 = arith.constant dense<0.000000e+00> : vector<8xf32>
    %274 = vector.multi_reduction <add>, %273, %cst_97 [1] : vector<8x128xf32> to vector<8xf32>
    %275 = vector.shape_cast %35 : vector<8xi32> to vector<1x8xi32>
    %276 = vector.shape_cast %68 : vector<8xi32> to vector<1x8xi32>
    %277 = vector.shape_cast %101 : vector<8xi32> to vector<1x8xi32>
    %278 = vector.shape_cast %134 : vector<8xi32> to vector<1x8xi32>
    %279 = vector.shape_cast %167 : vector<8xi32> to vector<1x8xi32>
    %280 = vector.shape_cast %200 : vector<8xi32> to vector<1x8xi32>
    %281 = vector.shape_cast %233 : vector<8xi32> to vector<1x8xi32>
    %282 = vector.shape_cast %266 : vector<8xi32> to vector<1x8xi32>
    %283 = tpu.concatenate %275, %276, %277, %278, %279, %280, %281, %282 in 0 : vector<1x8xi32>, vector<1x8xi32>, vector<1x8xi32>, vector<1x8xi32>, vector<1x8xi32>, vector<1x8xi32>, vector<1x8xi32>, vector<1x8xi32> -> vector<8x8xi32>
    %c0_98 = arith.constant 0 : index
    %c0_99 = arith.constant 0 : index
    %c0_100 = arith.constant 0 : index
    %284 = vector.load %arg5[%c0_98, %c0_99, %c0_100] : memref<1x8x8xi32, #tpu.memory_space<vmem>>, vector<1x8x8xi32>
    %285 = vector.shape_cast %284 : vector<1x8x8xi32> to vector<8x8xi32>
    %286 = vector.shape_cast %283 : vector<8x8xi32> to vector<1x8x8xi32>
    tpu.vector_store %arg5[%c0_98, %c0_99, %c0_100], %286 {strides = array<i32>} : memref<1x8x8xi32, #tpu.memory_space<vmem>>, vector<1x8x8xi32>,
    %287 = vector.shape_cast %43 : vector<8xf32> to vector<1x8xf32>
    %288 = vector.shape_cast %76 : vector<8xf32> to vector<1x8xf32>
    %289 = vector.shape_cast %109 : vector<8xf32> to vector<1x8xf32>
    %290 = vector.shape_cast %142 : vector<8xf32> to vector<1x8xf32>
    %291 = vector.shape_cast %175 : vector<8xf32> to vector<1x8xf32>
    %292 = vector.shape_cast %208 : vector<8xf32> to vector<1x8xf32>
    %293 = vector.shape_cast %241 : vector<8xf32> to vector<1x8xf32>
    %294 = vector.shape_cast %274 : vector<8xf32> to vector<1x8xf32>
    %295 = tpu.concatenate %287, %288, %289, %290, %291, %292, %293, %294 in 0 : vector<1x8xf32>, vector<1x8xf32>, vector<1x8xf32>, vector<1x8xf32>, vector<1x8xf32>, vector<1x8xf32>, vector<1x8xf32>, vector<1x8xf32> -> vector<8x8xf32>
    %c0_101 = arith.constant 0 : index
    %c0_102 = arith.constant 0 : index
    %c0_103 = arith.constant 0 : index
    %296 = vector.load %arg6[%c0_101, %c0_102, %c0_103] : memref<1x8x8xf32, #tpu.memory_space<vmem>>, vector<1x8x8xf32>
    %297 = vector.shape_cast %296 : vector<1x8x8xf32> to vector<8x8xf32>
    %298 = vector.shape_cast %295 : vector<8x8xf32> to vector<1x8x8xf32>
    tpu.vector_store %arg6[%c0_101, %c0_102, %c0_103], %298 {strides = array<i32>} : memref<1x8x8xf32, #tpu.memory_space<vmem>>, vector<1x8x8xf32>,
    return
  }
  func.func @transform_0(%arg0: i32) -> (i32, i32) {
    %c0_i32 = arith.constant 0 : i32
    %c0_i32_0 = arith.constant 0 : i32
    %c0_i32_1 = arith.constant 0 : i32
    return %c0_i32, %c0_i32_0 : i32, i32
  }
  func.func @transform_1(%arg0: i32) -> (i32, i32) {
    %c0_i32 = arith.constant 0 : i32
    %c0_i32_0 = arith.constant 0 : i32
    %c0_i32_1 = arith.constant 0 : i32
    return %c0_i32, %c0_i32_0 : i32, i32
  }
  func.func @transform_2(%arg0: i32) -> (i32, i32, i32) {
    %c0_i32 = arith.constant 0 : i32
    %c0_i32_0 = arith.constant 0 : i32
    %c0_i32_1 = arith.constant 0 : i32
    return %arg0, %c0_i32, %c0_i32_0 : i32, i32, i32
  }
  func.func @transform_3(%arg0: i32) -> (i32, i32, i32, i32) {
    %c0_i32 = arith.constant 0 : i32
    %c0_i32_0 = arith.constant 0 : i32
    %c0_i32_1 = arith.constant 0 : i32
    %c0_i32_2 = arith.constant 0 : i32
    return %arg0, %c0_i32, %c0_i32_0, %c0_i32_1 : i32, i32, i32, i32
  }
  func.func @transform_4(%arg0: i32) -> (i32, i32, i32) {
    %c0_i32 = arith.constant 0 : i32
    %c0_i32_0 = arith.constant 0 : i32
    %c0_i32_1 = arith.constant 0 : i32
    return %arg0, %c0_i32, %c0_i32_0 : i32, i32, i32
  }
  func.func @transform_5(%arg0: i32) -> (i32, i32, i32) {
    %c0_i32 = arith.constant 0 : i32
    %c0_i32_0 = arith.constant 0 : i32
    %c0_i32_1 = arith.constant 0 : i32
    return %arg0, %c0_i32, %c0_i32_0 : i32, i32, i32
  }
  func.func @transform_6(%arg0: i32) -> (i32, i32, i32) {
    %c0_i32 = arith.constant 0 : i32
    %c0_i32_0 = arith.constant 0 : i32
    %c0_i32_1 = arith.constant 0 : i32
    return %arg0, %c0_i32, %c0_i32_0 : i32, i32, i32
  }
}

</mosaic_0001>

<llo_original>
// kernel: tpu_custom_call.1
$region0: #{tpu_custom_call.1}
  #allocation0 [shape = 'u32[]', space=smem, size = 0x4, offset = 0x4, fixed_abs, tag = 'smem constant byte address 0x4 - core index']
  #allocation1 [shape = 'u32[144,128]{1,0:T(1,128)}', space=vmem, size = 0x12000, scoped, tag = 'internal scratch']
  %s0 = inlined_call_operand.hbm [shape: f32[128,128], index: 0, kind: input, shape index: {}]
  %s1 = inlined_call_operand.vmem [shape: f32[1,128], index: 1, kind: input, shape index: {}]
  %s2 = inlined_call_operand.vmem [shape: s32[2,8,1], index: 2, kind: input, shape index: {}]
  %s3 = inlined_call_operand.hbm [shape: f32[2,8,8,128], index: 3, kind: input, shape index: {}]
  %s4 = inlined_call_operand.hbm [shape: s32[2,8,8], index: 4, kind: output, shape index: {0}]
  %s5 = inlined_call_operand.hbm [shape: f32[2,8,8], index: 5, kind: output, shape index: {1}]
  %s6 = inlined_call_operand.hbm [shape: f32[2,8,128], index: 6, kind: output, shape index: {2}]
  %7 = xla_tuple %s4, %s5, %s6
  %s8 = sld [smem:[#allocation0]]
  $region73: #{tpu_custom_call.1} parent=0
    _
  %s10 = ssub.s32 1, %s8
  %s11 = scalar_select 0, %s10, %s8
  $region1: #{tpu_custom_call.1} parent=0
    #allocation2 [shape = 'u8[65536]{0}', space=vmem, size = 0x10000, scoped, tag = 'input window, operand 0, single buffered']
    #allocation3 [shape = 's32[2]{0}', space=sflag, size = 0x8, scoped, tag = 'scoped memory for tpu_custom_call.1']
    #allocation4 [shape = 's32[2]{0}', space=sflag, size = 0x8, scoped, tag = 'scoped memory for tpu_custom_call.1']
    #allocation5 [shape = 'u8[65536]{0}', space=vmem, size = 0x10000, scoped, tag = 'input window, operand 3']
    #allocation6 [shape = 's32[2]{0}', space=sflag, size = 0x8, scoped, tag = 'scoped memory for tpu_custom_call.1']
    #allocation7 [shape = 'u8[8192]{0}', space=vmem, size = 0x2000, scoped, tag = 'output window, operand 0']
    #allocation8 [shape = 'u8[8192]{0}', space=vmem, size = 0x2000, scoped, tag = 'output window, operand 1']
    #allocation9 [shape = 's32[2]{0}', space=sflag, size = 0x8, scoped, tag = 'scoped memory for tpu_custom_call.1']
    #allocation10 [shape = 'u8[8192]{0}', space=vmem, size = 0x2000, scoped, tag = 'output window, operand 2']
    %12 = vsyncpa [#allocation3], 0
    %13 = vsyncpa [#allocation6], 0
    %s14 = scalar_lea.sflag [#allocation6], 1
    %15 = vsyncpa %s14, 0
    %16 = vsyncpa [#allocation4], 0
    %s17 = scalar_lea.sflag [#allocation4], 1
    %18 = vsyncpa %s17, 0
    %19 = vsyncpa [#allocation9], 0
    %s20 = scalar_lea.sflag [#allocation9], 1
    %21 = vsyncpa %s20, 0
    loop: start=0, step=1, limit=4
    $region2: #{tpu_custom_call.1} parent=1 // loop_pre_header
      _
    $region3: #{tpu_custom_call.1} parent=1 // loop_header
      %s23 = sphi 0, %s27
      %p24 = scmp.ge.s32.totalorder %s23, 4
      %s31 = sphi 0, %s31
      %s33 = sphi 0, %s31
      %s34 = sphi 0, %s33
      %s48 = sphi 0, %s34
      %s52 = sphi 0, %s52
      %s54 = sphi 0, %s52
      %s55 = sphi 0, %s54
      %s69 = sphi 0, %s55
      %s75 = sphi 0, %s77
      %s78 = sphi 0, %s75
      %s79 = sphi 0, %s78
      %s95 = sphi 0, %s79
      %s101 = sphi 0, %s103
      %s104 = sphi 0, %s101
      %s105 = sphi 0, %s104
      %s121 = sphi 0, %s105
      %s127 = sphi 0, %s129
      %s130 = sphi 0, %s127
      %s131 = sphi 0, %s130
      %s147 = sphi 0, %s131
      %s153 = sphi 0, %s155
      %s156 = sphi 0, %s153
      %s157 = sphi 0, %s156
      %s173 = sphi 0, %s157
      %s179 = sphi 0, %s181
      %s182 = sphi 0, %s179
      %s183 = sphi 0, %s182
      %s199 = sphi 0, %s183
    $region4: #{tpu_custom_call.1} parent=1 // loop_header_branch
      %26 = sbr.rel (%p24) target = $region8
    $region5: #{tpu_custom_call.1} parent=1 // loop_body
      %s28 = ssub.s32 %s23, 1
      %s29 = ssub.s32 %s23, 2
      %s30 = sadd.s32 %s23, 1
      %s32 = sadd.s32 %s31, 1
      %p35 = scmp.eq.s32.totalorder %s23, 1
      %p36 = scmp.ne.s32.totalorder %s31, %s33
      %p37 = scmp.eq.s32.totalorder %s23, 0
      %p38 = por %p36, %p37
      %p39 = scmp.ne.s32.totalorder %s31, %s33
      %p40 = scmp.eq.s32.totalorder %s28, 1
      %p41 = por %p39, %p40
      %p42 = scmp.ne.s32.totalorder %s33, %s34
      %p43 = scmp.eq.s32.totalorder %s28, 0
      %p44 = por %p42, %p43
      %p45 = scmp.ne.s32.totalorder %s33, %s34
      %p46 = scmp.eq.s32.totalorder %s29, 1
      %p47 = por %p45, %p46
      %p49 = scmp.ne.s32.totalorder %s34, %s48
      %p50 = scmp.eq.s32.totalorder %s29, 0
      %p51 = por %p49, %p50
      %s53 = sadd.s32 %s52, 1
      %p56 = scmp.eq.s32.totalorder %s23, 1
      %p57 = scmp.ne.s32.totalorder %s52, %s54
      %p58 = scmp.eq.s32.totalorder %s23, 0
      %p59 = por %p57, %p58
      %p60 = scmp.ne.s32.totalorder %s52, %s54
      %p61 = scmp.eq.s32.totalorder %s28, 1
      %p62 = por %p60, %p61
      %p63 = scmp.ne.s32.totalorder %s54, %s55
      %p64 = scmp.eq.s32.totalorder %s28, 0
      %p65 = por %p63, %p64
      %p66 = scmp.ne.s32.totalorder %s54, %s55
      %p67 = scmp.eq.s32.totalorder %s29, 1
      %p68 = por %p66, %p67
      %p70 = scmp.ne.s32.totalorder %s55, %s69
      %p71 = scmp.eq.s32.totalorder %s29, 0
      %p72 = por %p70, %p71
      %s73 = ssub.s32 %s23, %s30
      %p74 = scmp.eq.s32.totalorder %s73, 0
      %s76 = sadd.s32 %s75, 1
      %s77 = scalar_select %p74, %s75, %s76
      %p80 = pneg %p74
      %p81 = scmp.eq.s32.totalorder %s23, 1
      %p82 = por %p80, %p81
      %p83 = scmp.ne.s32.totalorder %s75, %s78
      %p84 = scmp.eq.s32.totalorder %s23, 0
      %p85 = por %p83, %p84
      %p86 = scmp.ne.s32.totalorder %s75, %s78
      %p87 = scmp.eq.s32.totalorder %s28, 1
      %p88 = por %p86, %p87
      %p89 = scmp.ne.s32.totalorder %s78, %s79
      %p90 = scmp.eq.s32.totalorder %s28, 0
      %p91 = por %p89, %p90
      %p92 = scmp.ne.s32.totalorder %s78, %s79
      %p93 = scmp.eq.s32.totalorder %s29, 1
      %p94 = por %p92, %p93
      %p96 = scmp.ne.s32.totalorder %s79, %s95
      %p97 = scmp.eq.s32.totalorder %s29, 0
      %p98 = por %p96, %p97
      %s99 = ssub.s32 %s23, %s30
      %p100 = scmp.eq.s32.totalorder %s99, 0
      %s102 = sadd.s32 %s101, 1
      %s103 = scalar_select %p100, %s101, %s102
      %p106 = pneg %p100
      %p107 = scmp.eq.s32.totalorder %s23, 1
      %p108 = por %p106, %p107
      %p109 = scmp.ne.s32.totalorder %s101, %s104
      %p110 = scmp.eq.s32.totalorder %s23, 0
      %p111 = por %p109, %p110
      %p112 = scmp.ne.s32.totalorder %s101, %s104
      %p113 = scmp.eq.s32.totalorder %s28, 1
      %p114 = por %p112, %p113
      %p115 = scmp.ne.s32.totalorder %s104, %s105
      %p116 = scmp.eq.s32.totalorder %s28, 0
      %p117 = por %p115, %p116
      %p118 = scmp.ne.s32.totalorder %s104, %s105
      %p119 = scmp.eq.s32.totalorder %s29, 1
      %p120 = por %p118, %p119
      %p122 = scmp.ne.s32.totalorder %s105, %s121
      %p123 = scmp.eq.s32.totalorder %s29, 0
      %p124 = por %p122, %p123
      %s125 = ssub.s32 %s23, %s30
      %p126 = scmp.eq.s32.totalorder %s125, 0
      %s128 = sadd.s32 %s127, 1
      %s129 = scalar_select %p126, %s127, %s128
      %p132 = pneg %p126
      %p133 = scmp.eq.s32.totalorder %s23, 1
      %p134 = por %p132, %p133
      %p135 = scmp.ne.s32.totalorder %s127, %s130
      %p136 = scmp.eq.s32.totalorder %s23, 0
      %p137 = por %p135, %p136
      %p138 = scmp.ne.s32.totalorder %s127, %s130
      %p139 = scmp.eq.s32.totalorder %s28, 1
      %p140 = por %p138, %p139
      %p141 = scmp.ne.s32.totalorder %s130, %s131
      %p142 = scmp.eq.s32.totalorder %s28, 0
      %p143 = por %p141, %p142
      %p144 = scmp.ne.s32.totalorder %s130, %s131
      %p145 = scmp.eq.s32.totalorder %s29, 1
      %p146 = por %p144, %p145
      %p148 = scmp.ne.s32.totalorder %s131, %s147
      %p149 = scmp.eq.s32.totalorder %s29, 0
      %p150 = por %p148, %p149
      %s151 = ssub.s32 %s23, %s30
      %p152 = scmp.eq.s32.totalorder %s151, 0
      %s154 = sadd.s32 %s153, 1
      %s155 = scalar_select %p152, %s153, %s154
      %p158 = pneg %p152
      %p159 = scmp.eq.s32.totalorder %s23, 1
      %p160 = por %p158, %p159
      %p161 = scmp.ne.s32.totalorder %s153, %s156
      %p162 = scmp.eq.s32.totalorder %s23, 0
      %p163 = por %p161, %p162
      %p164 = scmp.ne.s32.totalorder %s153, %s156
      %p165 = scmp.eq.s32.totalorder %s28, 1
      %p166 = por %p164, %p165
      %p167 = scmp.ne.s32.totalorder %s156, %s157
      %p168 = scmp.eq.s32.totalorder %s28, 0
      %p169 = por %p167, %p168
      %p170 = scmp.ne.s32.totalorder %s156, %s157
      %p171 = scmp.eq.s32.totalorder %s29, 1
      %p172 = por %p170, %p171
      %p174 = scmp.ne.s32.totalorder %s157, %s173
      %p175 = scmp.eq.s32.totalorder %s29, 0
      %p176 = por %p174, %p175
      %s177 = ssub.s32 %s23, %s30
      %p178 = scmp.eq.s32.totalorder %s177, 0
      %s180 = sadd.s32 %s179, 1
      %s181 = scalar_select %p178, %s179, %s180
      %p184 = pneg %p178
      %p185 = scmp.eq.s32.totalorder %s23, 1
      %p186 = por %p184, %p185
      %p187 = scmp.ne.s32.totalorder %s179, %s182
      %p188 = scmp.eq.s32.totalorder %s23, 0
      %p189 = por %p187, %p188
      %p190 = scmp.ne.s32.totalorder %s179, %s182
      %p191 = scmp.eq.s32.totalorder %s28, 1
      %p192 = por %p190, %p191
      %p193 = scmp.ne.s32.totalorder %s182, %s183
      %p194 = scmp.eq.s32.totalorder %s28, 0
      %p195 = por %p193, %p194
      %p196 = scmp.ne.s32.totalorder %s182, %s183
      %p197 = scmp.eq.s32.totalorder %s29, 1
      %p198 = por %p196, %p197
      %p200 = scmp.ne.s32.totalorder %s183, %s199
      %p201 = scmp.eq.s32.totalorder %s29, 0
      %p202 = por %p200, %p201
      %p203 = scmp.le.s32.totalorder 1, %s23
      %p204 = scmp.lt.s32.totalorder %s23, 3
      %p205 = pnand %p203, %p204
      %p206 = pneg %p205
      // Predicated region
      $region9: #{tpu_custom_call.1} parent=5 // pred_check
        _
      $region10: #{tpu_custom_call.1} parent=5 // pred_check_branch
        %208 = sbr.rel (%p205) target = $region12
      $region11: #{tpu_custom_call.1} parent=5 // pred_region
        %s209 = ssub.s32 %s23, 1
        // Predicated region
        $region13: #{tpu_custom_call.1} parent=11 // pred_check
          %p210 = pneg %p44
        $region14: #{tpu_custom_call.1} parent=11 // pred_check_branch
          %212 = sbr.rel (%p210) target = $region16
        $region15: #{tpu_custom_call.1} parent=11 // pred_region
          %s214 = ssub.s32 2048, 2048
          %215 = vsyncadd [#allocation3], %s214
          %s216 = sshll.u32 [#allocation2], 4
          %s217 = int_to_ptr.vmem [resolvable:$true] %s216
          %222 = dma.hbm_to_vmem [thread:$0]  %s0, 2048, %s217, [#allocation3], 128, 128, 8
        $region16: #{tpu_custom_call.1} parent=11 // pred_fallthru
          _
        // Predicated region
        $region17: #{tpu_custom_call.1} parent=11 // pred_check
          %p223 = pneg %p65
        $region18: #{tpu_custom_call.1} parent=11 // pred_check_branch
          %225 = sbr.rel (%p223) target = $region20
        $region19: #{tpu_custom_call.1} parent=11 // pred_region
          _
        $region20: #{tpu_custom_call.1} parent=11 // pred_fallthru
          _
      $region12: #{tpu_custom_call.1} parent=5 // pred_fallthru
        _
      %p226 = scmp.lt.s32.totalorder %s23, 2
      // Predicated region
      $region21: #{tpu_custom_call.1} parent=5 // pred_check
        %p227 = pneg %p226
      $region22: #{tpu_custom_call.1} parent=5 // pred_check_branch
        %229 = sbr.rel (%p227) target = $region24
      $region23: #{tpu_custom_call.1} parent=5 // pred_region
        // Predicated region
        $region25: #{tpu_custom_call.1} parent=23 // pred_check
          %p230 = pneg %p85
        $region26: #{tpu_custom_call.1} parent=23 // pred_check_branch
          %232 = sbr.rel (%p230) target = $region28
        $region27: #{tpu_custom_call.1} parent=23 // pred_region
          %p233 = scmp.lt.s32.totalorder %s23, 1
          %s234 = scalar_select %p233, %s23, 1
          %s235 = smul.addr %s234, 8
          %s236 = scalar_lea.vmem %s2, %s235
        $region28: #{tpu_custom_call.1} parent=23 // pred_fallthru
          _
        // Predicated region
        $region29: #{tpu_custom_call.1} parent=23 // pred_check
          %p237 = pneg %p111
        $region30: #{tpu_custom_call.1} parent=23 // pred_check_branch
          %239 = sbr.rel (%p237) target = $region32
        $region31: #{tpu_custom_call.1} parent=23 // pred_region
          %s240 = sand.u32 %s101, 1
          %s241 = scalar_lea.sflag [#allocation6], %s240
          %s242 = sand.u32 %s101, 1
          %s243 = smul.addr %s242, 64
          %s244 = scalar_lea.vmem [#allocation5], %s243
          %s246 = ssub.s32 1024, 1024
          %247 = vsyncadd %s241, %s246
          %s248 = smul.addr %s23, 8
          %s249 = smul.addr %s248, 128
          %s250 = scalar_lea.hbm %s3, %s249
          %s251 = sshll.u32 %s244, 4
          %s252 = int_to_ptr.vmem [resolvable:$true] %s251
          %257 = dma.hbm_to_vmem [thread:$0]  %s250, 1024, %s252, %s241, 128, 128, 8
        $region32: #{tpu_custom_call.1} parent=23 // pred_fallthru
          _
      $region24: #{tpu_custom_call.1} parent=5 // pred_fallthru
        _
      %p258 = scmp.le.s32.totalorder 1, %s23
      %p259 = scmp.lt.s32.totalorder %s23, 3
      %p260 = pnand %p258, %p259
      %p261 = pneg %p260
      // Predicated region
      $region33: #{tpu_custom_call.1} parent=5 // pred_check
        _
      $region34: #{tpu_custom_call.1} parent=5 // pred_check_branch
        %263 = sbr.rel (%p260) target = $region36
      $region35: #{tpu_custom_call.1} parent=5 // pred_region
        %s264 = ssub.s32 %s23, 1
        // Predicated region
        $region37: #{tpu_custom_call.1} parent=35 // pred_check
          %p265 = pneg %p44
        $region38: #{tpu_custom_call.1} parent=35 // pred_check_branch
          %267 = sbr.rel (%p265) target = $region40
        $region39: #{tpu_custom_call.1} parent=35 // pred_region
          %268 = dma.done [#allocation3], 2048
        $region40: #{tpu_custom_call.1} parent=35 // pred_fallthru
          _
        %s269 = sand.u32 %s104, 1
        %s270 = scalar_lea.sflag [#allocation6], %s269
        %s271 = sand.u32 %s104, 1
        %s272 = smul.addr %s271, 64
        %s273 = scalar_lea.vmem [#allocation5], %s272
        // Predicated region
        $region41: #{tpu_custom_call.1} parent=35 // pred_check
          %p274 = pneg %p117
        $region42: #{tpu_custom_call.1} parent=35 // pred_check_branch
          %276 = sbr.rel (%p274) target = $region44
        $region43: #{tpu_custom_call.1} parent=35 // pred_region
          %277 = dma.done %s270, 1024
        $region44: #{tpu_custom_call.1} parent=35 // pred_fallthru
          _
        %p278 = pneg %p44
        %p279 = pneg %p41
        %p280 = pneg %p65
        %p281 = pneg %p62
        %p282 = scmp.lt.s32.totalorder %s28, 1
        %s283 = scalar_select %p282, %s28, 1
        %s284 = smul.addr %s283, 8
        %s285 = scalar_lea.vmem %s2, %s284
        %p286 = pneg %p91
        %p287 = pneg %p88
        %s288 = sand.u32 %s104, 1
        %s289 = scalar_lea.sflag [#allocation6], %s288
        %s290 = sand.u32 %s104, 1
        %s291 = smul.addr %s290, 64
        %s292 = scalar_lea.vmem [#allocation5], %s291
        %p293 = pneg %p117
        %p294 = pneg %p114
        %p295 = pneg %p143
        %p296 = pneg %p140
        %s297 = sand.u32 %s130, 1
        %s298 = scalar_lea.sflag [#allocation4], %s297
        %s299 = sand.u32 %s130, 1
        %s300 = smul.addr %s299, 8
        %s301 = scalar_lea.vmem [#allocation7], %s300
        %p302 = pneg %p169
        %p303 = pneg %p166
        %s304 = sand.u32 %s28, 1
        %s305 = scalar_lea.sflag [#allocation9], %s304
        %s306 = sand.u32 %s156, 1
        %s307 = smul.addr %s306, 8
        %s308 = scalar_lea.vmem [#allocation8], %s307
        %p309 = pneg %p195
        %p310 = pneg %p192
        %s311 = sand.u32 %s28, 1
        %s312 = scalar_lea.sflag [#allocation9], %s311
        %s313 = sand.u32 %s182, 1
        %s314 = smul.addr %s313, 8
        %s315 = scalar_lea.vmem [#allocation10], %s314
        %p316 = scmp.lt.s32.totalorder %s28, 1
        %s317 = scalar_select %p316, %s28, 1
        %s318 = smul.addr %s317, 8
        %s319 = scalar_lea.vmem %s2, %s318
        %v320 = vld [vmem:[#allocation2] sm:$0xff]
        %v321 = vld [vmem:[#allocation2 + $0x8] sm:$0xff]
        %v322 = vld [vmem:[#allocation2 + $0x10] sm:$0xff]
        %v323 = vld [vmem:[#allocation2 + $0x18] sm:$0xff]
        %v324 = vld [vmem:[#allocation2 + $0x20] sm:$0xff]
        %v325 = vld [vmem:[#allocation2 + $0x28] sm:$0xff]
        %v326 = vld [vmem:[#allocation2 + $0x30] sm:$0xff]
        %v327 = vld [vmem:[#allocation2 + $0x38] sm:$0xff]
        %v328 = vld [vmem:[#allocation2 + $0x40] sm:$0xff]
        %v329 = vld [vmem:[#allocation2 + $0x48] sm:$0xff]
        %v330 = vld [vmem:[#allocation2 + $0x50] sm:$0xff]
        %v331 = vld [vmem:[#allocation2 + $0x58] sm:$0xff]
        %v332 = vld [vmem:[#allocation2 + $0x60] sm:$0xff]
        %v333 = vld [vmem:[#allocation2 + $0x68] sm:$0xff]
        %v334 = vld [vmem:[#allocation2 + $0x70] sm:$0xff]
        %v335 = vld [vmem:[#allocation2 + $0x78] sm:$0xff]
        %v336 = vld [vmem:[%s1] sm:$0x1]
        %v337 = vlaneseq
        %v338 = vand.u32 %v337, 127
        %v339 = vld [vmem:[%s319] sm:$0xff]
        %340 = vset.pattern.permute.xlu0 0
        %341 = vperm.xlu0 %340, %v339
        %v342 = vpop.permute.xlu0 %341
        %vm343 = vcmp.eq.s32.totalorder %v338, %v342
        %v344 = vsel %vm343, 1, 0
        %v345 = vcvt.s32.f32 %v344
        %346 = vmatprep.subr.mxu0 0.0
        %347 = vmatpush1.msra.mxu0 %v320
        %348 = vmatprep.subr.mxu0 0.0
        %349 = vmatpush1.msra.mxu0 %v321
        %350 = vmatprep.subr.mxu0 0.0
        %351 = vmatpush1.msra.mxu0 %v322
        %352 = vmatprep.subr.mxu0 0.0
        %353 = vmatpush1.msra.mxu0 %v323
        %354 = vmatprep.subr.mxu0 0.0
        %355 = vmatpush1.msra.mxu0 %v324
        %356 = vmatprep.subr.mxu0 0.0
        %357 = vmatpush1.msra.mxu0 %v325
        %358 = vmatprep.subr.mxu0 0.0
        %359 = vmatpush1.msra.mxu0 %v326
        %360 = vmatprep.subr.mxu0 0.0
        %361 = vmatpush1.msra.mxu0 %v327
        %362 = vmatprep.subr.mxu0 0.0
        %363 = vmatpush1.msra.mxu0 %v328
        %364 = vmatprep.subr.mxu0 0.0
        %365 = vmatpush1.msra.mxu0 %v329
        %366 = vmatprep.subr.mxu0 0.0
        %367 = vmatpush1.msra.mxu0 %v330
        %368 = vmatprep.subr.mxu0 0.0
        %369 = vmatpush1.msra.mxu0 %v331
        %370 = vmatprep.subr.mxu0 0.0
        %371 = vmatpush1.msra.mxu0 %v332
        %372 = vmatprep.subr.mxu0 0.0
        %373 = vmatpush1.msra.mxu0 %v333
        %374 = vmatprep.subr.mxu0 0.0
        %375 = vmatpush1.msra.mxu0 %v334
        %376 = vmatprep.subr.mxu0 0.0
        %377 = vmatpush1.msra.mxu0 %v335
        %378 = vmatprep.subr.mxu0 0.0
        %379 = vmatpush1.msra.mxu0 0.0
        %380 = vmatprep.subr.mxu0 0.0
        %381 = vmatpush1.msra.mxu0 0.0
        %382 = vmatprep.subr.mxu0 0.0
        %383 = vmatpush1.msra.mxu0 0.0
        %384 = vmatprep.subr.mxu0 0.0
        %385 = vmatpush1.msra.mxu0 0.0
        %386 = vmatprep.subr.mxu0 0.0
        %387 = vmatpush1.msra.mxu0 0.0
        %388 = vmatprep.subr.mxu0 0.0
        %389 = vmatpush1.msra.mxu0 0.0
        %390 = vmatprep.subr.mxu0 0.0
        %391 = vmatpush1.msra.mxu0 0.0
        %392 = vmatprep.subr.mxu0 0.0
        %393 = vmatpush1.msra.mxu0 0.0
        %394 = vmatprep.subr.mxu0 0.0
        %395 = vmatpush1.msra.mxu0 0.0
        %396 = vmatprep.subr.mxu0 0.0
        %397 = vmatpush1.msra.mxu0 0.0
        %398 = vmatprep.subr.mxu0 0.0
        %399 = vmatpush1.msra.mxu0 0.0
        %400 = vmatprep.subr.mxu0 0.0
        %401 = vmatpush1.msra.mxu0 0.0
        %402 = vmatprep.subr.mxu0 0.0
        %403 = vmatpush1.msra.mxu0 0.0
        %404 = vmatprep.subr.mxu0 0.0
        %405 = vmatpush1.msra.mxu0 0.0
        %406 = vmatprep.subr.mxu0 0.0
        %407 = vmatpush1.msra.mxu0 0.0
        %408 = vmatprep.subr.mxu0 0.0
        %409 = vmatpush1.msra.mxu0 0.0
        %410 = vmatprep.mubr.f32.mxu0 0.0
        %411 = vmatmul.mubr.f32.gmra.mrb[0].mxu0 %v345
        %v412 = vpop.f32.mrb[0].mxu0
        %v413 = vadd.f32 0.0, %v412
        %v414 = vpop.f32.mrb[0].mxu0
        %415 = vdwg.mxu0
        %v417 = vlaneseq
        %v418 = vshrl.u32 %v417, 7
        %v419 = vsub.s32 0, %v418
        %v420 = vrot.slane %v336, %v419
        %v422 = vmul.f32 %v413, %v420
        %423 = vadd.xlane.f32.xlu0 %v422
        %v424 = vpop.xlane.xlu0 %423
        %v425 = vrcp.pop %v424
        %v426 = vmul.f32 %v422, %v425
        %427 = vst [vmem:[%s315] sm:$0xff] %v426
        %v428 = vld [vmem:[%s273] sm:$0xff]
        %v429 = vmax.f32 %v428, 1e-12
        %v430 = vlog2.pop %v429
        %v431 = vmul.f32 %v430, 0.6931472
        %v432 = vsub.f32 0.0, %v431
        %v433 = vlog2.pop %v432
        %v434 = vmul.f32 %v433, 0.6931472
        %v435 = vsub.f32 0.0, %v434
        %vm436 = vcmp.gt.f32.partialorder %v422, 0.0
        %v437 = vlog2.pop %v422
        %v438 = vmul.f32 %v437, 0.6931472
        %v439 = vadd.f32 %v438, %v435
        %v440 = vsel %vm436, %v439, -1e+30
        %441 = vmax.index.xlane.f32.xlu0 %v440
        %v442 = vpop.xlane.xlu0 %441
        %vm443 = vcmp.eq.s32.totalorder %v338, %v442
        %v444 = vsel %vm443, %v420, 0.0
        %445 = vadd.xlane.f32.xlu0 %v444
        %v446 = vpop.xlane.xlu0 %445
        %v447 = vsel %vm443, 1, 0
        %v448 = vcvt.s32.f32 %v447
        %449 = vmatprep.subr.mxu0 0.0
        %450 = vmatpush1.msra.mxu0 %v320
        %451 = vmatprep.subr.mxu0 0.0
        %452 = vmatpush1.msra.mxu0 %v321
        %453 = vmatprep.subr.mxu0 0.0
        %454 = vmatpush1.msra.mxu0 %v322
        %455 = vmatprep.subr.mxu0 0.0
        %456 = vmatpush1.msra.mxu0 %v323
        %457 = vmatprep.subr.mxu0 0.0
        %458 = vmatpush1.msra.mxu0 %v324
        %459 = vmatprep.subr.mxu0 0.0
        %460 = vmatpush1.msra.mxu0 %v325
        %461 = vmatprep.subr.mxu0 0.0
        %462 = vmatpush1.msra.mxu0 %v326
        %463 = vmatprep.subr.mxu0 0.0
        %464 = vmatpush1.msra.mxu0 %v327
        %465 = vmatprep.subr.mxu0 0.0
        %466 = vmatpush1.msra.mxu0 %v328
        %467 = vmatprep.subr.mxu0 0.0
        %468 = vmatpush1.msra.mxu0 %v329
        %469 = vmatprep.subr.mxu0 0.0
        %470 = vmatpush1.msra.mxu0 %v330
        %471 = vmatprep.subr.mxu0 0.0
        %472 = vmatpush1.msra.mxu0 %v331
        %473 = vmatprep.subr.mxu0 0.0
        %474 = vmatpush1.msra.mxu0 %v332
        %475 = vmatprep.subr.mxu0 0.0
        %476 = vmatpush1.msra.mxu0 %v333
        %477 = vmatprep.subr.mxu0 0.0
        %478 = vmatpush1.msra.mxu0 %v334
        %479 = vmatprep.subr.mxu0 0.0
        %480 = vmatpush1.msra.mxu0 %v335
        %481 = vmatprep.subr.mxu0 0.0
        %482 = vmatpush1.msra.mxu0 0.0
        %483 = vmatprep.subr.mxu0 0.0
        %484 = vmatpush1.msra.mxu0 0.0
        %485 = vmatprep.subr.mxu0 0.0
        %486 = vmatpush1.msra.mxu0 0.0
        %487 = vmatprep.subr.mxu0 0.0
        %488 = vmatpush1.msra.mxu0 0.0
        %489 = vmatprep.subr.mxu0 0.0
        %490 = vmatpush1.msra.mxu0 0.0
        %491 = vmatprep.subr.mxu0 0.0
        %492 = vmatpush1.msra.mxu0 0.0
        %493 = vmatprep.subr.mxu0 0.0
        %494 = vmatpush1.msra.mxu0 0.0
        %495 = vmatprep.subr.mxu0 0.0
        %496 = vmatpush1.msra.mxu0 0.0
        %497 = vmatprep.subr.mxu0 0.0
        %498 = vmatpush1.msra.mxu0 0.0
        %499 = vmatprep.subr.mxu0 0.0
        %500 = vmatpush1.msra.mxu0 0.0
        %501 = vmatprep.subr.mxu0 0.0
        %502 = vmatpush1.msra.mxu0 0.0
        %503 = vmatprep.subr.mxu0 0.0
        %504 = vmatpush1.msra.mxu0 0.0
        %505 = vmatprep.subr.mxu0 0.0
        %506 = vmatpush1.msra.mxu0 0.0
        %507 = vmatprep.subr.mxu0 0.0
        %508 = vmatpush1.msra.mxu0 0.0
        %509 = vmatprep.subr.mxu0 0.0
        %510 = vmatpush1.msra.mxu0 0.0
        %511 = vmatprep.subr.mxu0 0.0
        %512 = vmatpush1.msra.mxu0 0.0
        %513 = vmatprep.mubr.f32.mxu0 0.0
        %514 = vmatmul.mubr.f32.gmra.mrb[0].mxu0 %v448
        %v515 = vpop.f32.mrb[0].mxu0
        %v516 = vadd.f32 0.0, %v515
        %v517 = vpop.f32.mrb[0].mxu0
        %518 = vdwg.mxu0
        %v519 = vmul.f32 %v516, %v420
        %s520 = scalar_lea.vmem %s273, 8 [#allocation5]
        %v521 = vld [vmem:[%s520] sm:$0xff]
        %v522 = vmax.f32 %v521, 1e-12
        %v523 = vlog2.pop %v522
        %v524 = vmul.f32 %v523, 0.6931472
        %v525 = vsub.f32 0.0, %v524
        %v526 = vlog2.pop %v525
        %v527 = vmul.f32 %v526, 0.6931472
        %v528 = vsub.f32 0.0, %v527
        %vm529 = vcmp.gt.f32.partialorder %v519, 0.0
        %v530 = vlog2.pop %v519
        %v531 = vmul.f32 %v530, 0.6931472
        %v532 = vadd.f32 %v531, %v528
        %v533 = vsel %vm529, %v532, -1e+30
        %534 = vmax.index.xlane.f32.xlu0 %v533
        %v535 = vpop.xlane.xlu0 %534
        %vm536 = vcmp.eq.s32.totalorder %v338, %v535
        %v537 = vsel %vm536, %v420, 0.0
        %538 = vadd.xlane.f32.xlu0 %v537
        %v539 = vpop.xlane.xlu0 %538
        %v540 = vsel %vm536, 1, 0
        %v541 = vcvt.s32.f32 %v540
        %542 = vmatprep.subr.mxu0 0.0
        %543 = vmatpush1.msra.mxu0 %v320
        %544 = vmatprep.subr.mxu0 0.0
        %545 = vmatpush1.msra.mxu0 %v321
        %546 = vmatprep.subr.mxu0 0.0
        %547 = vmatpush1.msra.mxu0 %v322
        %548 = vmatprep.subr.mxu0 0.0
        %549 = vmatpush1.msra.mxu0 %v323
        %550 = vmatprep.subr.mxu0 0.0
        %551 = vmatpush1.msra.mxu0 %v324
        %552 = vmatprep.subr.mxu0 0.0
        %553 = vmatpush1.msra.mxu0 %v325
        %554 = vmatprep.subr.mxu0 0.0
        %555 = vmatpush1.msra.mxu0 %v326
        %556 = vmatprep.subr.mxu0 0.0
        %557 = vmatpush1.msra.mxu0 %v327
        %558 = vmatprep.subr.mxu0 0.0
        %559 = vmatpush1.msra.mxu0 %v328
        %560 = vmatprep.subr.mxu0 0.0
        %561 = vmatpush1.msra.mxu0 %v329
        %562 = vmatprep.subr.mxu0 0.0
        %563 = vmatpush1.msra.mxu0 %v330
        %564 = vmatprep.subr.mxu0 0.0
        %565 = vmatpush1.msra.mxu0 %v331
        %566 = vmatprep.subr.mxu0 0.0
        %567 = vmatpush1.msra.mxu0 %v332
        %568 = vmatprep.subr.mxu0 0.0
        %569 = vmatpush1.msra.mxu0 %v333
        %570 = vmatprep.subr.mxu0 0.0
        %571 = vmatpush1.msra.mxu0 %v334
        %572 = vmatprep.subr.mxu0 0.0
        %573 = vmatpush1.msra.mxu0 %v335
        %574 = vmatprep.subr.mxu0 0.0
        %575 = vmatpush1.msra.mxu0 0.0
        %576 = vmatprep.subr.mxu0 0.0
        %577 = vmatpush1.msra.mxu0 0.0
        %578 = vmatprep.subr.mxu0 0.0
        %579 = vmatpush1.msra.mxu0 0.0
        %580 = vmatprep.subr.mxu0 0.0
        %581 = vmatpush1.msra.mxu0 0.0
        %582 = vmatprep.subr.mxu0 0.0
        %583 = vmatpush1.msra.mxu0 0.0
        %584 = vmatprep.subr.mxu0 0.0
        %585 = vmatpush1.msra.mxu0 0.0
        %586 = vmatprep.subr.mxu0 0.0
        %587 = vmatpush1.msra.mxu0 0.0
        %588 = vmatprep.subr.mxu0 0.0
        %589 = vmatpush1.msra.mxu0 0.0
        %590 = vmatprep.subr.mxu0 0.0
        %591 = vmatpush1.msra.mxu0 0.0
        %592 = vmatprep.subr.mxu0 0.0
        %593 = vmatpush1.msra.mxu0 0.0
        %594 = vmatprep.subr.mxu0 0.0
        %595 = vmatpush1.msra.mxu0 0.0
        %596 = vmatprep.subr.mxu0 0.0
        %597 = vmatpush1.msra.mxu0 0.0
        %598 = vmatprep.subr.mxu0 0.0
        %599 = vmatpush1.msra.mxu0 0.0
        %600 = vmatprep.subr.mxu0 0.0
        %601 = vmatpush1.msra.mxu0 0.0
        %602 = vmatprep.subr.mxu0 0.0
        %603 = vmatpush1.msra.mxu0 0.0
        %604 = vmatprep.subr.mxu0 0.0
        %605 = vmatpush1.msra.mxu0 0.0
        %606 = vmatprep.mubr.f32.mxu0 0.0
        %607 = vmatmul.mubr.f32.gmra.mrb[0].mxu0 %v541
        %v608 = vpop.f32.mrb[0].mxu0
        %v609 = vadd.f32 0.0, %v608
        %v610 = vpop.f32.mrb[0].mxu0
        %611 = vdwg.mxu0
        %v612 = vmul.f32 %v609, %v420
        %s613 = scalar_lea.vmem %s273, 16 [#allocation5]
        %v614 = vld [vmem:[%s613] sm:$0xff]
        %v615 = vmax.f32 %v614, 1e-12
        %v616 = vlog2.pop %v615
        %v617 = vmul.f32 %v616, 0.6931472
        %v618 = vsub.f32 0.0, %v617
        %v619 = vlog2.pop %v618
        %v620 = vmul.f32 %v619, 0.6931472
        %v621 = vsub.f32 0.0, %v620
        %vm622 = vcmp.gt.f32.partialorder %v612, 0.0
        %v623 = vlog2.pop %v612
        %v624 = vmul.f32 %v623, 0.6931472
        %v625 = vadd.f32 %v624, %v621
        %v626 = vsel %vm622, %v625, -1e+30
        %627 = vmax.index.xlane.f32.xlu0 %v626
        %v628 = vpop.xlane.xlu0 %627
        %vm629 = vcmp.eq.s32.totalorder %v338, %v628
        %v630 = vsel %vm629, %v420, 0.0
        %631 = vadd.xlane.f32.xlu0 %v630
        %v632 = vpop.xlane.xlu0 %631
        %v633 = vsel %vm629, 1, 0
        %v634 = vcvt.s32.f32 %v633
        %635 = vmatprep.subr.mxu0 0.0
        %636 = vmatpush1.msra.mxu0 %v320
        %637 = vmatprep.subr.mxu0 0.0
        %638 = vmatpush1.msra.mxu0 %v321
        %639 = vmatprep.subr.mxu0 0.0
        %640 = vmatpush1.msra.mxu0 %v322
        %641 = vmatprep.subr.mxu0 0.0
        %642 = vmatpush1.msra.mxu0 %v323
        %643 = vmatprep.subr.mxu0 0.0
        %644 = vmatpush1.msra.mxu0 %v324
        %645 = vmatprep.subr.mxu0 0.0
        %646 = vmatpush1.msra.mxu0 %v325
        %647 = vmatprep.subr.mxu0 0.0
        %648 = vmatpush1.msra.mxu0 %v326
        %649 = vmatprep.subr.mxu0 0.0
        %650 = vmatpush1.msra.mxu0 %v327
        %651 = vmatprep.subr.mxu0 0.0
        %652 = vmatpush1.msra.mxu0 %v328
        %653 = vmatprep.subr.mxu0 0.0
        %654 = vmatpush1.msra.mxu0 %v329
        %655 = vmatprep.subr.mxu0 0.0
        %656 = vmatpush1.msra.mxu0 %v330
        %657 = vmatprep.subr.mxu0 0.0
        %658 = vmatpush1.msra.mxu0 %v331
        %659 = vmatprep.subr.mxu0 0.0
        %660 = vmatpush1.msra.mxu0 %v332
        %661 = vmatprep.subr.mxu0 0.0
        %662 = vmatpush1.msra.mxu0 %v333
        %663 = vmatprep.subr.mxu0 0.0
        %664 = vmatpush1.msra.mxu0 %v334
        %665 = vmatprep.subr.mxu0 0.0
        %666 = vmatpush1.msra.mxu0 %v335
        %667 = vmatprep.subr.mxu0 0.0
        %668 = vmatpush1.msra.mxu0 0.0
        %669 = vmatprep.subr.mxu0 0.0
        %670 = vmatpush1.msra.mxu0 0.0
        %671 = vmatprep.subr.mxu0 0.0
        %672 = vmatpush1.msra.mxu0 0.0
        %673 = vmatprep.subr.mxu0 0.0
        %674 = vmatpush1.msra.mxu0 0.0
        %675 = vmatprep.subr.mxu0 0.0
        %676 = vmatpush1.msra.mxu0 0.0
        %677 = vmatprep.subr.mxu0 0.0
        %678 = vmatpush1.msra.mxu0 0.0
        %679 = vmatprep.subr.mxu0 0.0
        %680 = vmatpush1.msra.mxu0 0.0
        %681 = vmatprep.subr.mxu0 0.0
        %682 = vmatpush1.msra.mxu0 0.0
        %683 = vmatprep.subr.mxu0 0.0
        %684 = vmatpush1.msra.mxu0 0.0
        %685 = vmatprep.subr.mxu0 0.0
        %686 = vmatpush1.msra.mxu0 0.0
        %687 = vmatprep.subr.mxu0 0.0
        %688 = vmatpush1.msra.mxu0 0.0
        %689 = vmatprep.subr.mxu0 0.0
        %690 = vmatpush1.msra.mxu0 0.0
        %691 = vmatprep.subr.mxu0 0.0
        %692 = vmatpush1.msra.mxu0 0.0
        %693 = vmatprep.subr.mxu0 0.0
        %694 = vmatpush1.msra.mxu0 0.0
        %695 = vmatprep.subr.mxu0 0.0
        %696 = vmatpush1.msra.mxu0 0.0
        %697 = vmatprep.subr.mxu0 0.0
        %698 = vmatpush1.msra.mxu0 0.0
        %699 = vmatprep.mubr.f32.mxu0 0.0
        %700 = vmatmul.mubr.f32.gmra.mrb[0].mxu0 %v634
        %v701 = vpop.f32.mrb[0].mxu0
        %v702 = vadd.f32 0.0, %v701
        %v703 = vpop.f32.mrb[0].mxu0
        %704 = vdwg.mxu0
        %v705 = vmul.f32 %v702, %v420
        %s706 = scalar_lea.vmem %s273, 24 [#allocation5]
        %v707 = vld [vmem:[%s706] sm:$0xff]
        %v708 = vmax.f32 %v707, 1e-12
        %v709 = vlog2.pop %v708
        %v710 = vmul.f32 %v709, 0.6931472
        %v711 = vsub.f32 0.0, %v710
        %v712 = vlog2.pop %v711
        %v713 = vmul.f32 %v712, 0.6931472
        %v714 = vsub.f32 0.0, %v713
        %vm715 = vcmp.gt.f32.partialorder %v705, 0.0
        %v716 = vlog2.pop %v705
        %v717 = vmul.f32 %v716, 0.6931472
        %v718 = vadd.f32 %v717, %v714
        %v719 = vsel %vm715, %v718, -1e+30
        %720 = vmax.index.xlane.f32.xlu0 %v719
        %v721 = vpop.xlane.xlu0 %720
        %vm722 = vcmp.eq.s32.totalorder %v338, %v721
        %v723 = vsel %vm722, %v420, 0.0
        %724 = vadd.xlane.f32.xlu0 %v723
        %v725 = vpop.xlane.xlu0 %724
        %v726 = vsel %vm722, 1, 0
        %v727 = vcvt.s32.f32 %v726
        %728 = vmatprep.subr.mxu0 0.0
        %729 = vmatpush1.msra.mxu0 %v320
        %730 = vmatprep.subr.mxu0 0.0
        %731 = vmatpush1.msra.mxu0 %v321
        %732 = vmatprep.subr.mxu0 0.0
        %733 = vmatpush1.msra.mxu0 %v322
        %734 = vmatprep.subr.mxu0 0.0
        %735 = vmatpush1.msra.mxu0 %v323
        %736 = vmatprep.subr.mxu0 0.0
        %737 = vmatpush1.msra.mxu0 %v324
        %738 = vmatprep.subr.mxu0 0.0
        %739 = vmatpush1.msra.mxu0 %v325
        %740 = vmatprep.subr.mxu0 0.0
        %741 = vmatpush1.msra.mxu0 %v326
        %742 = vmatprep.subr.mxu0 0.0
        %743 = vmatpush1.msra.mxu0 %v327
        %744 = vmatprep.subr.mxu0 0.0
        %745 = vmatpush1.msra.mxu0 %v328
        %746 = vmatprep.subr.mxu0 0.0
        %747 = vmatpush1.msra.mxu0 %v329
        %748 = vmatprep.subr.mxu0 0.0
        %749 = vmatpush1.msra.mxu0 %v330
        %750 = vmatprep.subr.mxu0 0.0
        %751 = vmatpush1.msra.mxu0 %v331
        %752 = vmatprep.subr.mxu0 0.0
        %753 = vmatpush1.msra.mxu0 %v332
        %754 = vmatprep.subr.mxu0 0.0
        %755 = vmatpush1.msra.mxu0 %v333
        %756 = vmatprep.subr.mxu0 0.0
        %757 = vmatpush1.msra.mxu0 %v334
        %758 = vmatprep.subr.mxu0 0.0
        %759 = vmatpush1.msra.mxu0 %v335
        %760 = vmatprep.subr.mxu0 0.0
        %761 = vmatpush1.msra.mxu0 0.0
        %762 = vmatprep.subr.mxu0 0.0
        %763 = vmatpush1.msra.mxu0 0.0
        %764 = vmatprep.subr.mxu0 0.0
        %765 = vmatpush1.msra.mxu0 0.0
        %766 = vmatprep.subr.mxu0 0.0
        %767 = vmatpush1.msra.mxu0 0.0
        %768 = vmatprep.subr.mxu0 0.0
        %769 = vmatpush1.msra.mxu0 0.0
        %770 = vmatprep.subr.mxu0 0.0
        %771 = vmatpush1.msra.mxu0 0.0
        %772 = vmatprep.subr.mxu0 0.0
        %773 = vmatpush1.msra.mxu0 0.0
        %774 = vmatprep.subr.mxu0 0.0
        %775 = vmatpush1.msra.mxu0 0.0
        %776 = vmatprep.subr.mxu0 0.0
        %777 = vmatpush1.msra.mxu0 0.0
        %778 = vmatprep.subr.mxu0 0.0
        %779 = vmatpush1.msra.mxu0 0.0
        %780 = vmatprep.subr.mxu0 0.0
        %781 = vmatpush1.msra.mxu0 0.0
        %782 = vmatprep.subr.mxu0 0.0
        %783 = vmatpush1.msra.mxu0 0.0
        %784 = vmatprep.subr.mxu0 0.0
        %785 = vmatpush1.msra.mxu0 0.0
        %786 = vmatprep.subr.mxu0 0.0
        %787 = vmatpush1.msra.mxu0 0.0
        %788 = vmatprep.subr.mxu0 0.0
        %789 = vmatpush1.msra.mxu0 0.0
        %790 = vmatprep.subr.mxu0 0.0
        %791 = vmatpush1.msra.mxu0 0.0
        %792 = vmatprep.mubr.f32.mxu0 0.0
        %793 = vmatmul.mubr.f32.gmra.mrb[0].mxu0 %v727
        %v794 = vpop.f32.mrb[0].mxu0
        %v795 = vadd.f32 0.0, %v794
        %v796 = vpop.f32.mrb[0].mxu0
        %797 = vdwg.mxu0
        %v798 = vmul.f32 %v795, %v420
        %s799 = scalar_lea.vmem %s273, 32 [#allocation5]
        %v800 = vld [vmem:[%s799] sm:$0xff]
        %v801 = vmax.f32 %v800, 1e-12
        %v802 = vlog2.pop %v801
        %v803 = vmul.f32 %v802, 0.6931472
        %v804 = vsub.f32 0.0, %v803
        %v805 = vlog2.pop %v804
        %v806 = vmul.f32 %v805, 0.6931472
        %v807 = vsub.f32 0.0, %v806
        %vm808 = vcmp.gt.f32.partialorder %v798, 0.0
        %v809 = vlog2.pop %v798
        %v810 = vmul.f32 %v809, 0.6931472
        %v811 = vadd.f32 %v810, %v807
        %v812 = vsel %vm808, %v811, -1e+30
        %813 = vmax.index.xlane.f32.xlu0 %v812
        %v814 = vpop.xlane.xlu0 %813
        %vm815 = vcmp.eq.s32.totalorder %v338, %v814
        %v816 = vsel %vm815, %v420, 0.0
        %817 = vadd.xlane.f32.xlu0 %v816
        %v818 = vpop.xlane.xlu0 %817
        %v819 = vsel %vm815, 1, 0
        %v820 = vcvt.s32.f32 %v819
        %821 = vmatprep.subr.mxu0 0.0
        %822 = vmatpush1.msra.mxu0 %v320
        %823 = vmatprep.subr.mxu0 0.0
        %824 = vmatpush1.msra.mxu0 %v321
        %825 = vmatprep.subr.mxu0 0.0
        %826 = vmatpush1.msra.mxu0 %v322
        %827 = vmatprep.subr.mxu0 0.0
        %828 = vmatpush1.msra.mxu0 %v323
        %829 = vmatprep.subr.mxu0 0.0
        %830 = vmatpush1.msra.mxu0 %v324
        %831 = vmatprep.subr.mxu0 0.0
        %832 = vmatpush1.msra.mxu0 %v325
        %833 = vmatprep.subr.mxu0 0.0
        %834 = vmatpush1.msra.mxu0 %v326
        %835 = vmatprep.subr.mxu0 0.0
        %836 = vmatpush1.msra.mxu0 %v327
        %837 = vmatprep.subr.mxu0 0.0
        %838 = vmatpush1.msra.mxu0 %v328
        %839 = vmatprep.subr.mxu0 0.0
        %840 = vmatpush1.msra.mxu0 %v329
        %841 = vmatprep.subr.mxu0 0.0
        %842 = vmatpush1.msra.mxu0 %v330
        %843 = vmatprep.subr.mxu0 0.0
        %844 = vmatpush1.msra.mxu0 %v331
        %845 = vmatprep.subr.mxu0 0.0
        %846 = vmatpush1.msra.mxu0 %v332
        %847 = vmatprep.subr.mxu0 0.0
        %848 = vmatpush1.msra.mxu0 %v333
        %849 = vmatprep.subr.mxu0 0.0
        %850 = vmatpush1.msra.mxu0 %v334
        %851 = vmatprep.subr.mxu0 0.0
        %852 = vmatpush1.msra.mxu0 %v335
        %853 = vmatprep.subr.mxu0 0.0
        %854 = vmatpush1.msra.mxu0 0.0
        %855 = vmatprep.subr.mxu0 0.0
        %856 = vmatpush1.msra.mxu0 0.0
        %857 = vmatprep.subr.mxu0 0.0
        %858 = vmatpush1.msra.mxu0 0.0
        %859 = vmatprep.subr.mxu0 0.0
        %860 = vmatpush1.msra.mxu0 0.0
        %861 = vmatprep.subr.mxu0 0.0
        %862 = vmatpush1.msra.mxu0 0.0
        %863 = vmatprep.subr.mxu0 0.0
        %864 = vmatpush1.msra.mxu0 0.0
        %865 = vmatprep.subr.mxu0 0.0
        %866 = vmatpush1.msra.mxu0 0.0
        %867 = vmatprep.subr.mxu0 0.0
        %868 = vmatpush1.msra.mxu0 0.0
        %869 = vmatprep.subr.mxu0 0.0
        %870 = vmatpush1.msra.mxu0 0.0
        %871 = vmatprep.subr.mxu0 0.0
        %872 = vmatpush1.msra.mxu0 0.0
        %873 = vmatprep.subr.mxu0 0.0
        %874 = vmatpush1.msra.mxu0 0.0
        %875 = vmatprep.subr.mxu0 0.0
        %876 = vmatpush1.msra.mxu0 0.0
        %877 = vmatprep.subr.mxu0 0.0
        %878 = vmatpush1.msra.mxu0 0.0
        %879 = vmatprep.subr.mxu0 0.0
        %880 = vmatpush1.msra.mxu0 0.0
        %881 = vmatprep.subr.mxu0 0.0
        %882 = vmatpush1.msra.mxu0 0.0
        %883 = vmatprep.subr.mxu0 0.0
        %884 = vmatpush1.msra.mxu0 0.0
        %885 = vmatprep.mubr.f32.mxu0 0.0
        %886 = vmatmul.mubr.f32.gmra.mrb[0].mxu0 %v820
        %v887 = vpop.f32.mrb[0].mxu0
        %v888 = vadd.f32 0.0, %v887
        %v889 = vpop.f32.mrb[0].mxu0
        %890 = vdwg.mxu0
        %v891 = vmul.f32 %v888, %v420
        %s892 = scalar_lea.vmem %s273, 40 [#allocation5]
        %v893 = vld [vmem:[%s892] sm:$0xff]
        %v894 = vmax.f32 %v893, 1e-12
        %v895 = vlog2.pop %v894
        %v896 = vmul.f32 %v895, 0.6931472
        %v897 = vsub.f32 0.0, %v896
        %v898 = vlog2.pop %v897
        %v899 = vmul.f32 %v898, 0.6931472
        %v900 = vsub.f32 0.0, %v899
        %vm901 = vcmp.gt.f32.partialorder %v891, 0.0
        %v902 = vlog2.pop %v891
        %v903 = vmul.f32 %v902, 0.6931472
        %v904 = vadd.f32 %v903, %v900
        %v905 = vsel %vm901, %v904, -1e+30
        %906 = vmax.index.xlane.f32.xlu0 %v905
        %v907 = vpop.xlane.xlu0 %906
        %vm908 = vcmp.eq.s32.totalorder %v338, %v907
        %v909 = vsel %vm908, %v420, 0.0
        %910 = vadd.xlane.f32.xlu0 %v909
        %v911 = vpop.xlane.xlu0 %910
        %v912 = vsel %vm908, 1, 0
        %v913 = vcvt.s32.f32 %v912
        %914 = vmatprep.subr.mxu0 0.0
        %915 = vmatpush1.msra.mxu0 %v320
        %916 = vmatprep.subr.mxu0 0.0
        %917 = vmatpush1.msra.mxu0 %v321
        %918 = vmatprep.subr.mxu0 0.0
        %919 = vmatpush1.msra.mxu0 %v322
        %920 = vmatprep.subr.mxu0 0.0
        %921 = vmatpush1.msra.mxu0 %v323
        %922 = vmatprep.subr.mxu0 0.0
        %923 = vmatpush1.msra.mxu0 %v324
        %924 = vmatprep.subr.mxu0 0.0
        %925 = vmatpush1.msra.mxu0 %v325
        %926 = vmatprep.subr.mxu0 0.0
        %927 = vmatpush1.msra.mxu0 %v326
        %928 = vmatprep.subr.mxu0 0.0
        %929 = vmatpush1.msra.mxu0 %v327
        %930 = vmatprep.subr.mxu0 0.0
        %931 = vmatpush1.msra.mxu0 %v328
        %932 = vmatprep.subr.mxu0 0.0
        %933 = vmatpush1.msra.mxu0 %v329
        %934 = vmatprep.subr.mxu0 0.0
        %935 = vmatpush1.msra.mxu0 %v330
        %936 = vmatprep.subr.mxu0 0.0
        %937 = vmatpush1.msra.mxu0 %v331
        %938 = vmatprep.subr.mxu0 0.0
        %939 = vmatpush1.msra.mxu0 %v332
        %940 = vmatprep.subr.mxu0 0.0
        %941 = vmatpush1.msra.mxu0 %v333
        %942 = vmatprep.subr.mxu0 0.0
        %943 = vmatpush1.msra.mxu0 %v334
        %944 = vmatprep.subr.mxu0 0.0
        %945 = vmatpush1.msra.mxu0 %v335
        %946 = vmatprep.subr.mxu0 0.0
        %947 = vmatpush1.msra.mxu0 0.0
        %948 = vmatprep.subr.mxu0 0.0
        %949 = vmatpush1.msra.mxu0 0.0
        %950 = vmatprep.subr.mxu0 0.0
        %951 = vmatpush1.msra.mxu0 0.0
        %952 = vmatprep.subr.mxu0 0.0
        %953 = vmatpush1.msra.mxu0 0.0
        %954 = vmatprep.subr.mxu0 0.0
        %955 = vmatpush1.msra.mxu0 0.0
        %956 = vmatprep.subr.mxu0 0.0
        %957 = vmatpush1.msra.mxu0 0.0
        %958 = vmatprep.subr.mxu0 0.0
        %959 = vmatpush1.msra.mxu0 0.0
        %960 = vmatprep.subr.mxu0 0.0
        %961 = vmatpush1.msra.mxu0 0.0
        %962 = vmatprep.subr.mxu0 0.0
        %963 = vmatpush1.msra.mxu0 0.0
        %964 = vmatprep.subr.mxu0 0.0
        %965 = vmatpush1.msra.mxu0 0.0
        %966 = vmatprep.subr.mxu0 0.0
        %967 = vmatpush1.msra.mxu0 0.0
        %968 = vmatprep.subr.mxu0 0.0
        %969 = vmatpush1.msra.mxu0 0.0
        %970 = vmatprep.subr.mxu0 0.0
        %971 = vmatpush1.msra.mxu0 0.0
        %972 = vmatprep.subr.mxu0 0.0
        %973 = vmatpush1.msra.mxu0 0.0
        %974 = vmatprep.subr.mxu0 0.0
        %975 = vmatpush1.msra.mxu0 0.0
        %976 = vmatprep.subr.mxu0 0.0
        %977 = vmatpush1.msra.mxu0 0.0
        %978 = vmatprep.mubr.f32.mxu0 0.0
        %979 = vmatmul.mubr.f32.gmra.mrb[0].mxu0 %v913
        %v980 = vpop.f32.mrb[0].mxu0
        %v981 = vadd.f32 0.0, %v980
        %v982 = vpop.f32.mrb[0].mxu0
        %983 = vdwg.mxu0
        %v984 = vmul.f32 %v981, %v420
        %s985 = scalar_lea.vmem %s273, 48 [#allocation5]
        %v986 = vld [vmem:[%s985] sm:$0xff]
        %v987 = vmax.f32 %v986, 1e-12
        %v988 = vlog2.pop %v987
        %v989 = vmul.f32 %v988, 0.6931472
        %v990 = vsub.f32 0.0, %v989
        %v991 = vlog2.pop %v990
        %v992 = vmul.f32 %v991, 0.6931472
        %v993 = vsub.f32 0.0, %v992
        %vm994 = vcmp.gt.f32.partialorder %v984, 0.0
        %v995 = vlog2.pop %v984
        %v996 = vmul.f32 %v995, 0.6931472
        %v997 = vadd.f32 %v996, %v993
        %v998 = vsel %vm994, %v997, -1e+30
        %999 = vmax.index.xlane.f32.xlu0 %v998
        %v1000 = vpop.xlane.xlu0 %999
        %vm1001 = vcmp.eq.s32.totalorder %v338, %v1000
        %v1002 = vsel %vm1001, %v420, 0.0
        %1003 = vadd.xlane.f32.xlu0 %v1002
        %v1004 = vpop.xlane.xlu0 %1003
        %v1005 = vsel %vm1001, 1, 0
        %v1006 = vcvt.s32.f32 %v1005
        %1007 = vmatprep.subr.mxu0 0.0
        %1008 = vmatpush1.msra.mxu0 %v320
        %1009 = vmatprep.subr.mxu0 0.0
        %1010 = vmatpush1.msra.mxu0 %v321
        %1011 = vmatprep.subr.mxu0 0.0
        %1012 = vmatpush1.msra.mxu0 %v322
        %1013 = vmatprep.subr.mxu0 0.0
        %1014 = vmatpush1.msra.mxu0 %v323
        %1015 = vmatprep.subr.mxu0 0.0
        %1016 = vmatpush1.msra.mxu0 %v324
        %1017 = vmatprep.subr.mxu0 0.0
        %1018 = vmatpush1.msra.mxu0 %v325
        %1019 = vmatprep.subr.mxu0 0.0
        %1020 = vmatpush1.msra.mxu0 %v326
        %1021 = vmatprep.subr.mxu0 0.0
        %1022 = vmatpush1.msra.mxu0 %v327
        %1023 = vmatprep.subr.mxu0 0.0
        %1024 = vmatpush1.msra.mxu0 %v328
        %1025 = vmatprep.subr.mxu0 0.0
        %1026 = vmatpush1.msra.mxu0 %v329
        %1027 = vmatprep.subr.mxu0 0.0
        %1028 = vmatpush1.msra.mxu0 %v330
        %1029 = vmatprep.subr.mxu0 0.0
        %1030 = vmatpush1.msra.mxu0 %v331
        %1031 = vmatprep.subr.mxu0 0.0
        %1032 = vmatpush1.msra.mxu0 %v332
        %1033 = vmatprep.subr.mxu0 0.0
        %1034 = vmatpush1.msra.mxu0 %v333
        %1035 = vmatprep.subr.mxu0 0.0
        %1036 = vmatpush1.msra.mxu0 %v334
        %1037 = vmatprep.subr.mxu0 0.0
        %1038 = vmatpush1.msra.mxu0 %v335
        %1039 = vmatprep.subr.mxu0 0.0
        %1040 = vmatpush1.msra.mxu0 0.0
        %1041 = vmatprep.subr.mxu0 0.0
        %1042 = vmatpush1.msra.mxu0 0.0
        %1043 = vmatprep.subr.mxu0 0.0
        %1044 = vmatpush1.msra.mxu0 0.0
        %1045 = vmatprep.subr.mxu0 0.0
        %1046 = vmatpush1.msra.mxu0 0.0
        %1047 = vmatprep.subr.mxu0 0.0
        %1048 = vmatpush1.msra.mxu0 0.0
        %1049 = vmatprep.subr.mxu0 0.0
        %1050 = vmatpush1.msra.mxu0 0.0
        %1051 = vmatprep.subr.mxu0 0.0
        %1052 = vmatpush1.msra.mxu0 0.0
        %1053 = vmatprep.subr.mxu0 0.0
        %1054 = vmatpush1.msra.mxu0 0.0
        %1055 = vmatprep.subr.mxu0 0.0
        %1056 = vmatpush1.msra.mxu0 0.0
        %1057 = vmatprep.subr.mxu0 0.0
        %1058 = vmatpush1.msra.mxu0 0.0
        %1059 = vmatprep.subr.mxu0 0.0
        %1060 = vmatpush1.msra.mxu0 0.0
        %1061 = vmatprep.subr.mxu0 0.0
        %1062 = vmatpush1.msra.mxu0 0.0
        %1063 = vmatprep.subr.mxu0 0.0
        %1064 = vmatpush1.msra.mxu0 0.0
        %1065 = vmatprep.subr.mxu0 0.0
        %1066 = vmatpush1.msra.mxu0 0.0
        %1067 = vmatprep.subr.mxu0 0.0
        %1068 = vmatpush1.msra.mxu0 0.0
        %1069 = vmatprep.subr.mxu0 0.0
        %1070 = vmatpush1.msra.mxu0 0.0
        %1071 = vmatprep.mubr.f32.mxu0 0.0
        %1072 = vmatmul.mubr.f32.gmra.mrb[0].mxu0 %v1006
        %v1073 = vpop.f32.mrb[0].mxu0
        %v1074 = vadd.f32 0.0, %v1073
        %v1075 = vpop.f32.mrb[0].mxu0
        %1076 = vdwg.mxu0
        %v1077 = vmul.f32 %v1074, %v420
        %s1078 = scalar_lea.vmem %s273, 56 [#allocation5]
        %v1079 = vld [vmem:[%s1078] sm:$0xff]
        %v1080 = vmax.f32 %v1079, 1e-12
        %v1081 = vlog2.pop %v1080
        %v1082 = vmul.f32 %v1081, 0.6931472
        %v1083 = vsub.f32 0.0, %v1082
        %v1084 = vlog2.pop %v1083
        %v1085 = vmul.f32 %v1084, 0.6931472
        %v1086 = vsub.f32 0.0, %v1085
        %vm1087 = vcmp.gt.f32.partialorder %v1077, 0.0
        %v1088 = vlog2.pop %v1077
        %v1089 = vmul.f32 %v1088, 0.6931472
        %v1090 = vadd.f32 %v1089, %v1086
        %v1091 = vsel %vm1087, %v1090, -1e+30
        %1092 = vmax.index.xlane.f32.xlu0 %v1091
        %v1093 = vpop.xlane.xlu0 %1092
        %vm1094 = vcmp.eq.s32.totalorder %v338, %v1093
        %v1095 = vsel %vm1094, %v420, 0.0
        %1096 = vadd.xlane.f32.xlu0 %v1095
        %v1097 = vpop.xlane.xlu0 %1096
        %v1098 = vlaneseq
        %v1099 = vshrl.u32 %v1098, 7
        %v1100 = vsub.s32 %v338, %v1099
        %v1101 = vrot.slane %v442, %v1100
        %v1102 = vlaneseq
        %v1103 = vshrl.u32 %v1102, 7
        %v1104 = vsub.s32 %v338, %v1103
        %v1105 = vrot.slane %v535, %v1104
        %v1106 = vlaneseq
        %v1107 = vshrl.u32 %v1106, 7
        %v1108 = vsub.s32 %v338, %v1107
        %v1109 = vrot.slane %v628, %v1108
        %v1110 = vlaneseq
        %v1111 = vshrl.u32 %v1110, 7
        %v1112 = vsub.s32 %v338, %v1111
        %v1113 = vrot.slane %v721, %v1112
        %v1114 = vlaneseq
        %v1115 = vshrl.u32 %v1114, 7
        %v1116 = vsub.s32 %v338, %v1115
        %v1117 = vrot.slane %v814, %v1116
        %v1118 = vlaneseq
        %v1119 = vshrl.u32 %v1118, 7
        %v1120 = vsub.s32 %v338, %v1119
        %v1121 = vrot.slane %v907, %v1120
        %v1122 = vlaneseq
        %v1123 = vshrl.u32 %v1122, 7
        %v1124 = vsub.s32 %v338, %v1123
        %v1125 = vrot.slane %v1000, %v1124
        %v1126 = vlaneseq
        %v1127 = vshrl.u32 %v1126, 7
        %v1128 = vsub.s32 %v338, %v1127
        %v1129 = vrot.slane %v1093, %v1128
        %vm1130 = vcmask 1040384
        %v1131 = vsel %vm1130, %v1101, %v1105
        %vm1132 = vcmask 1041408
        %v1133 = vsel %vm1132, %v1131, %v1109
        %vm1134 = vcmask 1042432
        %v1135 = vsel %vm1134, %v1133, %v1113
        %vm1136 = vcmask 1043456
        %v1137 = vsel %vm1136, %v1135, %v1117
        %vm1138 = vcmask 1044480
        %v1139 = vsel %vm1138, %v1137, %v1121
        %vm1140 = vcmask 1045504
        %v1141 = vsel %vm1140, %v1139, %v1125
        %vm1142 = vcmask 1046528
        %v1143 = vsel %vm1142, %v1141, %v1129
        %vm1144 = vcmask 64512
        %1145 = vst.msk [vmem:[%s301] sm:$0xff] %vm1144, %v1143
        %v1147 = vlaneseq
        %v1148 = vshrl.u32 %v1147, 7
        %v1149 = vsub.s32 %v338, %v1148
        %v1150 = vrot.slane %v446, %v1149
        %v1153 = vlaneseq
        %v1154 = vshrl.u32 %v1153, 7
        %v1155 = vsub.s32 %v338, %v1154
        %v1156 = vrot.slane %v539, %v1155
        %v1159 = vlaneseq
        %v1160 = vshrl.u32 %v1159, 7
        %v1161 = vsub.s32 %v338, %v1160
        %v1162 = vrot.slane %v632, %v1161
        %v1165 = vlaneseq
        %v1166 = vshrl.u32 %v1165, 7
        %v1167 = vsub.s32 %v338, %v1166
        %v1168 = vrot.slane %v725, %v1167
        %v1171 = vlaneseq
        %v1172 = vshrl.u32 %v1171, 7
        %v1173 = vsub.s32 %v338, %v1172
        %v1174 = vrot.slane %v818, %v1173
        %v1177 = vlaneseq
        %v1178 = vshrl.u32 %v1177, 7
        %v1179 = vsub.s32 %v338, %v1178
        %v1180 = vrot.slane %v911, %v1179
        %v1183 = vlaneseq
        %v1184 = vshrl.u32 %v1183, 7
        %v1185 = vsub.s32 %v338, %v1184
        %v1186 = vrot.slane %v1004, %v1185
        %v1189 = vlaneseq
        %v1190 = vshrl.u32 %v1189, 7
        %v1191 = vsub.s32 %v338, %v1190
        %v1192 = vrot.slane %v1097, %v1191
        %v1194 = vsel %vm1130, %v1150, %v1156
        %v1195 = vsel %vm1132, %v1194, %v1162
        %v1196 = vsel %vm1134, %v1195, %v1168
        %v1197 = vsel %vm1136, %v1196, %v1174
        %v1198 = vsel %vm1138, %v1197, %v1180
        %v1199 = vsel %vm1140, %v1198, %v1186
        %v1200 = vsel %vm1142, %v1199, %v1192
        %1201 = vst.msk [vmem:[%s308] sm:$0xff] %vm1144, %v1200
        %s1202 = sand.u32 %s130, 1
        %s1203 = scalar_lea.sflag [#allocation4], %s1202
        %s1204 = sand.u32 %s130, 1
        %s1205 = smul.addr %s1204, 8
        %s1206 = scalar_lea.vmem [#allocation7], %s1205
        %s1207 = sand.u32 %s28, 1
        %s1208 = scalar_lea.sflag [#allocation9], %s1207
        %s1209 = sand.u32 %s156, 1
        %s1210 = smul.addr %s1209, 8
        %s1211 = scalar_lea.vmem [#allocation8], %s1210
        %s1212 = sand.u32 %s28, 1
        %s1213 = scalar_lea.sflag [#allocation9], %s1212
        %s1214 = sand.u32 %s182, 1
        %s1215 = smul.addr %s1214, 8
        %s1216 = scalar_lea.vmem [#allocation10], %s1215
        // Predicated region
        $region45: #{tpu_custom_call.1} parent=35 // pred_check
          %p1217 = pneg %p140
        $region46: #{tpu_custom_call.1} parent=35 // pred_check_branch
          %1219 = sbr.rel (%p1217) target = $region48
        $region47: #{tpu_custom_call.1} parent=35 // pred_region
          %s1221 = ssub.s32 128, 128
          %1222 = vsyncadd %s1203, %s1221
          %s1223 = smul.addr %s28, 128
          %s1224 = scalar_lea.hbm %s4, %s1223
          %s1226 = sshll.u32 %s1206, 4
          %s1227 = int_to_ptr.vmem [resolvable:$true] %s1226
          %1229 = dma.vmem_to_hbm [thread:$0]  %s1227, 128, %s1224, %s1203
        $region48: #{tpu_custom_call.1} parent=35 // pred_fallthru
          _
        // Predicated region
        $region49: #{tpu_custom_call.1} parent=35 // pred_check
          %p1230 = pneg %p166
        $region50: #{tpu_custom_call.1} parent=35 // pred_check_branch
          %1232 = sbr.rel (%p1230) target = $region52
        $region51: #{tpu_custom_call.1} parent=35 // pred_region
          %s1234 = ssub.s32 128, 128
          %1235 = vsyncadd %s1208, %s1234
          %s1236 = smul.addr %s28, 128
          %s1237 = scalar_lea.hbm %s5, %s1236
          %s1239 = sshll.u32 %s1211, 4
          %s1240 = int_to_ptr.vmem [resolvable:$true] %s1239
          %1242 = dma.vmem_to_hbm [thread:$0]  %s1240, 128, %s1237, %s1208
        $region52: #{tpu_custom_call.1} parent=35 // pred_fallthru
          _
        // Predicated region
        $region53: #{tpu_custom_call.1} parent=35 // pred_check
          %p1243 = pneg %p192
        $region54: #{tpu_custom_call.1} parent=35 // pred_check_branch
          %1245 = sbr.rel (%p1243) target = $region56
        $region55: #{tpu_custom_call.1} parent=35 // pred_region
          %s1247 = ssub.s32 128, 128
          %1248 = vsyncadd %s1213, %s1247
          %s1249 = smul.addr %s28, 128
          %s1250 = scalar_lea.hbm %s6, %s1249
          %s1252 = sshll.u32 %s1216, 4
          %s1253 = int_to_ptr.vmem [resolvable:$true] %s1252
          %1255 = dma.vmem_to_hbm [thread:$0]  %s1253, 128, %s1250, %s1213
        $region56: #{tpu_custom_call.1} parent=35 // pred_fallthru
          _
      $region36: #{tpu_custom_call.1} parent=5 // pred_fallthru
        _
      %p1256 = scmp.le.s32.totalorder 2, %s23
      // Predicated region
      $region57: #{tpu_custom_call.1} parent=5 // pred_check
        %p1257 = pneg %p1256
      $region58: #{tpu_custom_call.1} parent=5 // pred_check_branch
        %1259 = sbr.rel (%p1257) target = $region60
      $region59: #{tpu_custom_call.1} parent=5 // pred_region
        %s1260 = ssub.s32 %s23, 2
        // Predicated region
        $region61: #{tpu_custom_call.1} parent=59 // pred_check
          %p1261 = pneg %p146
        $region62: #{tpu_custom_call.1} parent=59 // pred_check_branch
          %1263 = sbr.rel (%p1261) target = $region64
        $region63: #{tpu_custom_call.1} parent=59 // pred_region
          %s1264 = sand.u32 %s131, 1
          %s1265 = scalar_lea.sflag [#allocation4], %s1264
          %s1266 = sand.u32 %s131, 1
          %s1267 = smul.addr %s1266, 8
          %s1268 = scalar_lea.vmem [#allocation7], %s1267
          %1269 = dma.done %s1265, 128
        $region64: #{tpu_custom_call.1} parent=59 // pred_fallthru
          _
        // Predicated region
        $region65: #{tpu_custom_call.1} parent=59 // pred_check
          %p1270 = pneg %p172
        $region66: #{tpu_custom_call.1} parent=59 // pred_check_branch
          %1272 = sbr.rel (%p1270) target = $region68
        $region67: #{tpu_custom_call.1} parent=59 // pred_region
          %s1273 = sand.u32 %s29, 1
          %s1274 = scalar_lea.sflag [#allocation9], %s1273
          %s1275 = sand.u32 %s157, 1
          %s1276 = smul.addr %s1275, 8
          %s1277 = scalar_lea.vmem [#allocation8], %s1276
          %1278 = dma.done %s1274, 128
        $region68: #{tpu_custom_call.1} parent=59 // pred_fallthru
          _
        // Predicated region
        $region69: #{tpu_custom_call.1} parent=59 // pred_check
          %p1279 = pneg %p198
        $region70: #{tpu_custom_call.1} parent=59 // pred_check_branch
          %1281 = sbr.rel (%p1279) target = $region72
        $region71: #{tpu_custom_call.1} parent=59 // pred_region
          %s1282 = sand.u32 %s29, 1
          %s1283 = scalar_lea.sflag [#allocation9], %s1282
          %s1284 = sand.u32 %s183, 1
          %s1285 = smul.addr %s1284, 8
          %s1286 = scalar_lea.vmem [#allocation10], %s1285
          %1287 = dma.done %s1283, 128
        $region72: #{tpu_custom_call.1} parent=59 // pred_fallthru
          _
      $region60: #{tpu_custom_call.1} parent=5 // pred_fallthru
        _
    $region6: #{tpu_custom_call.1} parent=1 // loop_footer
      %s27 = sadd.s32 1, %s23
    $region7: #{tpu_custom_call.1} parent=1 // loop_footer_branch
      %22 = sbr.rel target = $region3
    $region8: #{tpu_custom_call.1} parent=1 // loop_exit
      _
    %1288 = vsyncpa [#allocation3], 1
    %s1289 = scalar_lea.sflag [#allocation3], 1
    %1290 = vsyncpa %s1289, 1
    %1291 = vsyncpa [#allocation6], 1
    %s1292 = scalar_lea.sflag [#allocation6], 1
    %1293 = vsyncpa %s1292, 1
    %1294 = vsyncpa [#allocation4], 1
    %s1295 = scalar_lea.sflag [#allocation4], 1
    %1296 = vsyncpa %s1295, 1
    %1297 = vsyncpa [#allocation9], 1
    %s1298 = scalar_lea.sflag [#allocation9], 1
    %1299 = vsyncpa %s1298, 1

</llo_original>
